<compile_context>
chip_gen: v6e
topology: v6e:2x2x1
jax: 0.10.0
libtpu: 0.0.40
codegen_flags: <defaults>
</compile_context>

<pallas_src>
import numpy as np
import jax
import jax.numpy as jnp
from jax.experimental import pallas as pl
from jax.experimental.pallas import tpu as pltpu


# ---------------------------------------------------------------------------
# Kernel 1: row-blocked softmax + cross-entropy partial sums (parallel grid).
# ---------------------------------------------------------------------------
def _softmax_ce_kernel(logits_ref, labels_ref, probs_ref, part_ref):
    lg = logits_ref[...].astype(jnp.float32)          # (TM1, C)
    lab = labels_ref[...]                             # (TM1, 1) int32
    tm, num_classes = lg.shape

    valid = (lab < num_classes).astype(jnp.float32)   # padded rows carry label == C

    m = jnp.max(lg, axis=-1, keepdims=True)
    z = lg - m
    ez = jnp.exp(z)
    sez = jnp.sum(ez, axis=-1, keepdims=True)
    logp = z - jnp.log(sez)

    # Zero padded rows so the Lovasz kernel sees error == 0 for them.
    probs_ref[...] = (ez / sez) * valid

    onehot = (jax.lax.broadcasted_iota(jnp.int32, (tm, num_classes), 1)
              == lab).astype(jnp.float32)             # all-zero for padded rows
    nll = -jnp.sum(onehot * logp)                     # block partial of sum(-log p[y])
    cnt = jnp.sum(valid)                              # block partial of #valid rows

    lane = jax.lax.broadcasted_iota(jnp.int32, (1, 1, 128), 2)
    part_ref[...] = jnp.where(lane == 0, nll, jnp.where(lane == 1, cnt, 0.0))


# ---------------------------------------------------------------------------
# Kernel 2: Lovasz-Softmax flat, classes='present'.
#   grid = (C, row_blocks, point_chunks)  ->  ("parallel", "arbitrary", "arbitrary")
# ---------------------------------------------------------------------------
def _lovasz_kernel(counts_ref,                 # (C,) int32 in SMEM (scalar prefetch)
                   lrow_ref,                   # (1, TN)  int32: chunk labels, lane-dense
                   lcolj_ref,                  # (TN, 1)  int32: chunk labels, column
                   lcoli_ref,                  # (TM, 1)  int32: block-row labels
                   prow_ref,                   # (1, 1, TN) f32: probs[:, c] chunk
                   pcol_ref,                   # (1, TM, 1) f32: probs[block, c]
                   loss_ref,                   # (1, 1, 128) f32 output (per class)
                   acc_ref):                   # (TM, 128) f32 scratch
    c = pl.program_id(0)
    i = pl.program_id(1)
    j = pl.program_id(2)
    nj = pl.num_programs(2)

    @pl.when(jnp.logical_and(i == 0, j == 0))
    def _():
        loss_ref[...] = jnp.zeros_like(loss_ref)

    @pl.when(j == 0)
    def _():
        acc_ref[...] = jnp.zeros_like(acc_ref)

    lrow = lrow_ref[...]                       # (1, TN)
    lcol_j = lcolj_ref[...]                    # (TN, 1)
    lcol_i = lcoli_ref[...]                    # (TM, 1)
    prow = prow_ref[0]                         # (1, TN)
    pcol = pcol_ref[0]                         # (TM, 1)

    tm = lcol_i.shape[0]
    tn = lrow.shape[1]

    # Chunk-side (compare points) and block-row-side errors.  Same f32 expression
    # on bit-identical stored values => the == tie-break below matches a stable sort.
    fg_row = (lrow == c).astype(jnp.float32)                  # (1, TN)
    e_row = jnp.abs(fg_row - prow)                            # (1, TN)
    fg_col = (lcol_i == c).astype(jnp.float32)                # (TM, 1)
    e_col = jnp.abs(fg_col - pcol)                            # (TM, 1)

    # before[r, k] == 1 iff chunk point k sorts strictly before block row r in the
    # descending sort of the errors (stable tie-break by original index).
    idx_row = jax.lax.broadcasted_iota(jnp.int32, (1, tn), 1) + j * tn
    idx_col = jax.lax.broadcasted_iota(jnp.int32, (tm, 1), 0) + i * tm
    before_b = jnp.logical_or(
        e_row > e_col,
        jnp.logical_and(e_row == e_col, idx_row < idx_col))   # (TM, TN) bool
    before = before_b.astype(jnp.bfloat16)                    # direct bool->bf16

    # Fused RHS: lane 0 = ones (counts all "before" points -> rank_lt),
    # lanes >= 1 = fg of the chunk points (counts the foreground ones -> a_lt).
    # 0/1 operands are exact in bf16; accumulate in f32 on the MXU.
    lane = jax.lax.broadcasted_iota(jnp.int32, (tn, 128), 1)
    fg_chunk = (lcol_j == c).astype(jnp.float32)              # (TN, 1)
    rhs = jnp.where(lane == 0, jnp.float32(1.0), fg_chunk).astype(jnp.bfloat16)

    acc_ref[...] = acc_ref[...] + jnp.dot(before, rhs,
                                          preferred_element_type=jnp.float32)

    @pl.when(j == nj - 1)
    def _():
        acc = acc_ref[...]
        rank_lt = acc[:, 0:1]                  # #points strictly before each row
        a_lt = acc[:, 1:2]                     # ... that are foreground
        b_lt = rank_lt - a_lt
        a_leq = a_lt + fg_col                  # leq = lt + self
        b_leq = b_lt + (1.0 - fg_col)

        gts = counts_ref[c].astype(jnp.float32)
        eps = jnp.float32(1e-12)
        jac_leq = 1.0 - (gts - a_leq) / jnp.maximum(gts + b_leq, eps)
        jac_lt = 1.0 - (gts - a_lt) / jnp.maximum(gts + b_lt, eps)
        grad = jac_leq - jac_lt                # lovasz_grad at each row's sorted rank

        loss_ref[...] = loss_ref[...] + jnp.sum(e_col * grad)


# ---------------------------------------------------------------------------
# Wrapper
# ---------------------------------------------------------------------------
def downstream_loss(logits, labels, *, ce_block_rows=512, lov_block_rows=256,
                    lov_chunk=512):
    """logits: [P, C] float, labels: [P] int.  Returns scalar f32 loss."""
    P, C = logits.shape
    tm1, tm, tn = ce_block_rows, lov_block_rows, lov_chunk
    mult = int(np.lcm.reduce(np.array([tm1, tm, tn], dtype=np.int64)))
    p_pad = ((P + mult - 1) // mult) * mult
    pad = p_pad - P

    logits_p = jnp.pad(logits.astype(jnp.float32), ((0, pad), (0, 0)))
    labels_p = jnp.pad(labels.astype(jnp.int32), (0, pad), constant_values=C)
    labels_col = labels_p.reshape(p_pad, 1)
    labels_row = labels_p.reshape(1, p_pad)

    # ---- kernel 1: softmax + cross entropy (parallel partial sums) --------
    nb1 = p_pad // tm1
    probs, parts = pl.pallas_call(
        _softmax_ce_kernel,
        grid=(nb1,),
        in_specs=[
            pl.BlockSpec((tm1, C), lambda i: (i, 0)),
            pl.BlockSpec((tm1, 1), lambda i: (i, 0)),
        ],
        out_specs=(
            pl.BlockSpec((tm1, C), lambda i: (i, 0)),
            pl.BlockSpec((1, 1, 128), lambda i: (i, 0, 0)),
        ),
        out_shape=(
            jax.ShapeDtypeStruct((p_pad, C), jnp.float32),
            jax.ShapeDtypeStruct((nb1, 1, 128), jnp.float32),
        ),
        compiler_params=pltpu.CompilerParams(
            dimension_semantics=("parallel",),
            vmem_limit_bytes=32 * 1024 * 1024),
        cost_estimate=pl.CostEstimate(
            flops=int(10 * p_pad * C),
            transcendentals=int(2 * p_pad * C),
            bytes_accessed=int(8 * p_pad * C + 4 * p_pad)),
    )(logits_p, labels_col)

    ce = jnp.sum(parts[:, 0, 0]) / jnp.sum(parts[:, 0, 1])

    # Per-class foreground counts (gts / present): tiny wrapper-side op, prefetched
    # to SMEM.  Padded rows have label == C and never match.
    counts = jnp.sum(labels_p[:, None] == jnp.arange(C, dtype=jnp.int32)[None, :],
                     axis=0).astype(jnp.int32)                         # (C,)

    # Row (lane-dense) and column layouts of probs^T -- bit-identical values.
    probs_t = jnp.transpose(probs)                                      # (C, p_pad)
    probs_rows = probs_t.reshape(C, 1, p_pad)
    probs_cols = probs_t.reshape(C, p_pad, 1)

    # ---- kernel 2: Lovasz-Softmax flat -------------------------------------
    nbr = p_pad // tm
    nbc = p_pad // tn
    loss_pc = pl.pallas_call(
        _lovasz_kernel,
        grid_spec=pltpu.PrefetchScalarGridSpec(
            num_scalar_prefetch=1,
            grid=(C, nbr, nbc),
            in_specs=[
                pl.BlockSpec((1, tn), lambda c, i, j, cnt: (0, j)),
                pl.BlockSpec((tn, 1), lambda c, i, j, cnt: (j, 0)),
                pl.BlockSpec((tm, 1), lambda c, i, j, cnt: (i, 0)),
                pl.BlockSpec((1, 1, tn), lambda c, i, j, cnt: (c, 0, j)),
                pl.BlockSpec((1, tm, 1), lambda c, i, j, cnt: (c, i, 0)),
            ],
            out_specs=pl.BlockSpec((1, 1, 128), lambda c, i, j, cnt: (c, 0, 0)),
            scratch_shapes=[pltpu.VMEM((tm, 128), jnp.float32)]),
        out_shape=jax.ShapeDtypeStruct((C, 1, 128), jnp.float32),
        compiler_params=pltpu.CompilerParams(
            dimension_semantics=("parallel", "arbitrary", "arbitrary"),
            vmem_limit_bytes=32 * 1024 * 1024),
        cost_estimate=pl.CostEstimate(
            flops=int(2 * C * p_pad * p_pad * 128),
            transcendentals=0,
            bytes_accessed=int(C * (p_pad // tm) * (12 * p_pad + 8 * tm)
                               + 4 * C * p_pad)),
    )(counts, labels_row, labels_col, labels_col, probs_rows, probs_cols)

    loss_per_class = loss_pc[:, 0, 0]
    present = counts > 0
    n_present = jnp.sum(present.astype(jnp.float32))
    lovasz = jnp.where(
        n_present > 0,
        jnp.sum(jnp.where(present, loss_per_class, 0.0)) / jnp.maximum(n_present, 1.0),
        jnp.float32(0.0))
    return ce + lovasz


# ---------------------------------------------------------------------------
# Pure numpy reference of DownstreamLoss.forward (float64).
# ---------------------------------------------------------------------------
def _reference_loss(probas, labels):
    logits = np.asarray(probas, dtype=np.float64)
    labels = np.asarray(labels)
    P, C = logits.shape
    z = logits - logits.max(-1, keepdims=True)
    logp = z - np.log(np.exp(z).sum(-1, keepdims=True))
    ce = -np.mean(logp[np.arange(P), labels])
    probs = np.exp(logp)
    losses = []
    for c in range(C):
        fg = (labels == c).astype(np.float64)
        if fg.sum() == 0:
            continue
        errors = np.abs(fg - probs[:, c])
        order = np.argsort(-errors, kind="stable")
        errors_sorted = errors[order]
        fg_sorted = fg[order]
        gts = fg_sorted.sum()
        inter = gts - np.cumsum(fg_sorted)
        union = gts + np.cumsum(1.0 - fg_sorted)
        jac = 1.0 - inter / union
        if P > 1:
            jac[1:] = jac[1:] - jac[:-1]
        losses.append(np.dot(errors_sorted, jac))
    lov = float(np.mean(losses)) if losses else 0.0
    return ce + lov


if __name__ == "__main__":
    key = jax.random.PRNGKey(0)
    k1, k2 = jax.random.split(key)
    P, C = 16, 4
    probas = jax.random.normal(k1, (P, C), dtype=jnp.float32)   # logits [P, C]
    labels = jax.random.randint(k2, (P,), 0, C, dtype=jnp.int32)

    loss = downstream_loss(probas, labels)
    jax.block_until_ready(loss)

    ref = _reference_loss(probas, labels)
    np.testing.assert_allclose(float(loss), ref, rtol=1e-4, atol=1e-4)

    print("KERNEL_OK")
</pallas_src>

<mosaic_0001>
module attributes {stable_mosaic.version = 11 : i64} {
  func.func @_softmax_ce_kernel(%arg0: i32, %arg1: memref<512x4xf32, #tpu.memory_space<vmem>>, %arg2: memref<512x1xi32, #tpu.memory_space<vmem>>, %arg3: memref<512x4xf32, #tpu.memory_space<vmem>>, %arg4: memref<1x1x128xf32, #tpu.memory_space<vmem>>) attributes {dimension_semantics = [#tpu.dimension_semantics<parallel>], iteration_bounds = array<i64: 1>, scalar_prefetch = 0 : i64, scratch_operands = 0 : i64, tpu.core_type = #tpu.core_type<tc>, window_params = [{transform_indices = @transform_0, window_bounds = array<i64: 512, 4>}, {transform_indices = @transform_1, window_bounds = array<i64: 512, 1>}, {transform_indices = @transform_2, window_bounds = array<i64: 512, 4>}, {transform_indices = @transform_3, window_bounds = array<i64: 1, 1, 128>}]} {
    %c0 = arith.constant 0 : index
    %c0_0 = arith.constant 0 : index
    %0 = vector.load %arg1[%c0, %c0_0] : memref<512x4xf32, #tpu.memory_space<vmem>>, vector<512x4xf32>
    %c0_1 = arith.constant 0 : index
    %c0_2 = arith.constant 0 : index
    %1 = vector.load %arg2[%c0_1, %c0_2] : memref<512x1xi32, #tpu.memory_space<vmem>>, vector<512x1xi32>
    %c4_i32 = arith.constant 4 : i32
    %2 = vector.broadcast %c4_i32 : i32 to vector<512x1xi32>
    %3 = arith.cmpi slt, %1, %2 : vector<512x1xi32>
    %4 = arith.extui %3 : vector<512x1xi1> to vector<512x1xi32>
    %5 = arith.sitofp %4 : vector<512x1xi32> to vector<512x1xf32>
    %cst = arith.constant dense<0xFF800000> : vector<512xf32>
    %6 = vector.multi_reduction <maximumf>, %0, %cst [1] : vector<512x4xf32> to vector<512xf32>
    %7 = vector.shape_cast %6 : vector<512xf32> to vector<512x1xf32>
    %8 = vector.broadcast %7 : vector<512x1xf32> to vector<512x4xf32>
    %9 = arith.subf %0, %8 : vector<512x4xf32>
    %10 = math.exp %9 : vector<512x4xf32>
    %cst_3 = arith.constant dense<0.000000e+00> : vector<512xf32>
    %11 = vector.multi_reduction <add>, %10, %cst_3 [1] : vector<512x4xf32> to vector<512xf32>
    %12 = vector.shape_cast %11 : vector<512xf32> to vector<512x1xf32>
    %13 = math.log %12 : vector<512x1xf32>
    %14 = vector.broadcast %13 : vector<512x1xf32> to vector<512x4xf32>
    %15 = arith.subf %9, %14 : vector<512x4xf32>
    %16 = vector.broadcast %12 : vector<512x1xf32> to vector<512x4xf32>
    %17 = arith.divf %10, %16 : vector<512x4xf32>
    %18 = vector.broadcast %5 : vector<512x1xf32> to vector<512x4xf32>
    %19 = arith.mulf %17, %18 : vector<512x4xf32>
    %c0_4 = arith.constant 0 : index
    %c0_5 = arith.constant 0 : index
    %20 = vector.load %arg3[%c0_4, %c0_5] : memref<512x4xf32, #tpu.memory_space<vmem>>, vector<512x4xf32>
    tpu.vector_store %arg3[%c0_4, %c0_5], %19 {strides = array<i32>} : memref<512x4xf32, #tpu.memory_space<vmem>>, vector<512x4xf32>,
    %21 = tpu.iota {dimensions = array<i32: 1>} : vector<512x4xi32>
    %22 = vector.broadcast %1 : vector<512x1xi32> to vector<512x4xi32>
    %23 = arith.cmpi eq, %21, %22 : vector<512x4xi32>
    %24 = arith.extui %23 : vector<512x4xi1> to vector<512x4xi32>
    %25 = arith.sitofp %24 : vector<512x4xi32> to vector<512x4xf32>
    %26 = arith.mulf %25, %15 : vector<512x4xf32>
    %27 = vector.shape_cast %26 : vector<512x4xf32> to vector<1x512x4xf32>
    %cst_6 = arith.constant dense<0.000000e+00> : vector<1xf32>
    %28 = vector.multi_reduction <add>, %27, %cst_6 [1, 2] : vector<1x512x4xf32> to vector<1xf32>
    %29 = vector.shape_cast %28 : vector<1xf32> to vector<1x1x1xf32>
    %30 = vector.extract %29[0, 0, 0] : f32 from vector<1x1x1xf32>
    %cst_7 = arith.constant 0.000000e+00 : f32
    %31 = arith.subf %cst_7, %30 : f32
    %32 = vector.shape_cast %5 : vector<512x1xf32> to vector<1x512x1xf32>
    %cst_8 = arith.constant dense<0.000000e+00> : vector<1xf32>
    %33 = vector.multi_reduction <add>, %32, %cst_8 [1, 2] : vector<1x512x1xf32> to vector<1xf32>
    %34 = vector.shape_cast %33 : vector<1xf32> to vector<1x1x1xf32>
    %35 = vector.extract %34[0, 0, 0] : f32 from vector<1x1x1xf32>
    %36 = tpu.iota {dimensions = array<i32: 2>} : vector<1x1x128xi32>
    %c0_i32 = arith.constant 0 : i32
    %37 = vector.broadcast %c0_i32 : i32 to vector<1x1x128xi32>
    %38 = arith.cmpi eq, %36, %37 : vector<1x1x128xi32>
    %c1_i32 = arith.constant 1 : i32
    %39 = vector.broadcast %c1_i32 : i32 to vector<1x1x128xi32>
    %40 = arith.cmpi eq, %36, %39 : vector<1x1x128xi32>
    %cst_9 = arith.constant 0.000000e+00 : f32
    %41 = vector.broadcast %35 : f32 to vector<1x1x128xf32>
    %42 = vector.broadcast %cst_9 : f32 to vector<1x1x128xf32>
    %43 = arith.select %40, %41, %42 : vector<1x1x128xi1>, vector<1x1x128xf32>
    %44 = vector.broadcast %31 : f32 to vector<1x1x128xf32>
    %45 = arith.select %38, %44, %43 : vector<1x1x128xi1>, vector<1x1x128xf32>
    %c0_10 = arith.constant 0 : index
    %c0_11 = arith.constant 0 : index
    %c0_12 = arith.constant 0 : index
    %46 = vector.load %arg4[%c0_10, %c0_11, %c0_12] : memref<1x1x128xf32, #tpu.memory_space<vmem>>, vector<1x1x128xf32>
    tpu.vector_store %arg4[%c0_10, %c0_11, %c0_12], %45 {strides = array<i32>} : memref<1x1x128xf32, #tpu.memory_space<vmem>>, vector<1x1x128xf32>,
    return
  }
  func.func @transform_0(%arg0: i32) -> (i32, i32) {
    %c0_i32 = arith.constant 0 : i32
    %c0_i32_0 = arith.constant 0 : i32
    return %arg0, %c0_i32 : i32, i32
  }
  func.func @transform_1(%arg0: i32) -> (i32, i32) {
    %c0_i32 = arith.constant 0 : i32
    %c0_i32_0 = arith.constant 0 : i32
    return %arg0, %c0_i32 : i32, i32
  }
  func.func @transform_2(%arg0: i32) -> (i32, i32) {
    %c0_i32 = arith.constant 0 : i32
    %c0_i32_0 = arith.constant 0 : i32
    return %arg0, %c0_i32 : i32, i32
  }
  func.func @transform_3(%arg0: i32) -> (i32, i32, i32) {
    %c0_i32 = arith.constant 0 : i32
    %c0_i32_0 = arith.constant 0 : i32
    %c0_i32_1 = arith.constant 0 : i32
    return %arg0, %c0_i32, %c0_i32_0 : i32, i32, i32
  }
}

</mosaic_0001>

<llo_original>
// kernel: tpu_custom_call.1
$region0: #{tpu_custom_call.1}
  #allocation0 [shape = 'u32[]', space=smem, size = 0x4, offset = 0x4, fixed_abs, tag = 'smem constant byte address 0x4 - core index']
  #allocation1 [shape = 'u32[144,128]{1,0:T(1,128)}', space=vmem, size = 0x12000, scoped, tag = 'internal scratch']
  %s0 = inlined_call_operand.vmem [shape: f32[512,4], index: 0, kind: input, shape index: {}]
  %s1 = inlined_call_operand.vmem [shape: s32[512,1], index: 1, kind: input, shape index: {}]
  %s2 = inlined_call_operand.vmem [shape: f32[512,4], index: 2, kind: output, shape index: {0}]
  %s3 = inlined_call_operand.hbm [shape: f32[1,1,128], index: 3, kind: output, shape index: {1}]
  %4 = xla_tuple %s2, %s3
  %s5 = sld [smem:[#allocation0]]
  $region26: #{tpu_custom_call.1} parent=0
    _
  %s7 = ssub.s32 1, %s5
  %s8 = scalar_select 0, %s7, %s5
  $region1: #{tpu_custom_call.1} parent=0
    #allocation2 [shape = 'u8[512]{0}', space=vmem, size = 0x400, scoped, tag = 'output window, operand 1, single buffered']
    #allocation3 [shape = 's32[1]{0}', space=sflag, size = 0x4, scoped, tag = 'scoped memory for tpu_custom_call.1']
    %9 = vsyncpa [#allocation3], 0
    // Predicated region
    $region2: #{tpu_custom_call.1} parent=1 // pred_check
      _
    $region3: #{tpu_custom_call.1} parent=1 // pred_check_branch
      %11 = sbr.rel (0) target = $region5
    $region4: #{tpu_custom_call.1} parent=1 // pred_region
      _
    $region5: #{tpu_custom_call.1} parent=1 // pred_fallthru
      _
    // Predicated region
    $region6: #{tpu_custom_call.1} parent=1 // pred_check
      _
    $region7: #{tpu_custom_call.1} parent=1 // pred_check_branch
      %13 = sbr.rel (0) target = $region9
    $region8: #{tpu_custom_call.1} parent=1 // pred_region
      _
    $region9: #{tpu_custom_call.1} parent=1 // pred_fallthru
      _
    %v14 = vld [vmem:[%s0] sm:$0xff]
    %v15 = vld [vmem:[%s0 + $0x8] sm:$0xff]
    %v16 = vld [vmem:[%s0 + $0x10] sm:$0xff]
    %v17 = vld [vmem:[%s0 + $0x18] sm:$0xff]
    %v18 = vld [vmem:[%s0 + $0x20] sm:$0xff]
    %v19 = vld [vmem:[%s0 + $0x28] sm:$0xff]
    %v20 = vld [vmem:[%s0 + $0x30] sm:$0xff]
    %v21 = vld [vmem:[%s0 + $0x38] sm:$0xff]
    %v22 = vld [vmem:[%s0 + $0x40] sm:$0xff]
    %v23 = vld [vmem:[%s0 + $0x48] sm:$0xff]
    %v24 = vld [vmem:[%s0 + $0x50] sm:$0xff]
    %v25 = vld [vmem:[%s0 + $0x58] sm:$0xff]
    %v26 = vld [vmem:[%s0 + $0x60] sm:$0xff]
    %v27 = vld [vmem:[%s0 + $0x68] sm:$0xff]
    %v28 = vld [vmem:[%s0 + $0x70] sm:$0xff]
    %v29 = vld [vmem:[%s0 + $0x78] sm:$0xff]
    %v30 = vld [vmem:[%s0 + $0x80] sm:$0xff]
    %v31 = vld [vmem:[%s0 + $0x88] sm:$0xff]
    %v32 = vld [vmem:[%s0 + $0x90] sm:$0xff]
    %v33 = vld [vmem:[%s0 + $0x98] sm:$0xff]
    %v34 = vld [vmem:[%s0 + $0xa0] sm:$0xff]
    %v35 = vld [vmem:[%s0 + $0xa8] sm:$0xff]
    %v36 = vld [vmem:[%s0 + $0xb0] sm:$0xff]
    %v37 = vld [vmem:[%s0 + $0xb8] sm:$0xff]
    %v38 = vld [vmem:[%s0 + $0xc0] sm:$0xff]
    %v39 = vld [vmem:[%s0 + $0xc8] sm:$0xff]
    %v40 = vld [vmem:[%s0 + $0xd0] sm:$0xff]
    %v41 = vld [vmem:[%s0 + $0xd8] sm:$0xff]
    %v42 = vld [vmem:[%s0 + $0xe0] sm:$0xff]
    %v43 = vld [vmem:[%s0 + $0xe8] sm:$0xff]
    %v44 = vld [vmem:[%s0 + $0xf0] sm:$0xff]
    %v45 = vld [vmem:[%s0 + $0xf8] sm:$0xff]
    %v46 = vld [vmem:[%s0 + $0x100] sm:$0xff]
    %v47 = vld [vmem:[%s0 + $0x108] sm:$0xff]
    %v48 = vld [vmem:[%s0 + $0x110] sm:$0xff]
    %v49 = vld [vmem:[%s0 + $0x118] sm:$0xff]
    %v50 = vld [vmem:[%s0 + $0x120] sm:$0xff]
    %v51 = vld [vmem:[%s0 + $0x128] sm:$0xff]
    %v52 = vld [vmem:[%s0 + $0x130] sm:$0xff]
    %v53 = vld [vmem:[%s0 + $0x138] sm:$0xff]
    %v54 = vld [vmem:[%s0 + $0x140] sm:$0xff]
    %v55 = vld [vmem:[%s0 + $0x148] sm:$0xff]
    %v56 = vld [vmem:[%s0 + $0x150] sm:$0xff]
    %v57 = vld [vmem:[%s0 + $0x158] sm:$0xff]
    %v58 = vld [vmem:[%s0 + $0x160] sm:$0xff]
    %v59 = vld [vmem:[%s0 + $0x168] sm:$0xff]
    %v60 = vld [vmem:[%s0 + $0x170] sm:$0xff]
    %v61 = vld [vmem:[%s0 + $0x178] sm:$0xff]
    %v62 = vld [vmem:[%s0 + $0x180] sm:$0xff]
    %v63 = vld [vmem:[%s0 + $0x188] sm:$0xff]
    %v64 = vld [vmem:[%s0 + $0x190] sm:$0xff]
    %v65 = vld [vmem:[%s0 + $0x198] sm:$0xff]
    %v66 = vld [vmem:[%s0 + $0x1a0] sm:$0xff]
    %v67 = vld [vmem:[%s0 + $0x1a8] sm:$0xff]
    %v68 = vld [vmem:[%s0 + $0x1b0] sm:$0xff]
    %v69 = vld [vmem:[%s0 + $0x1b8] sm:$0xff]
    %v70 = vld [vmem:[%s0 + $0x1c0] sm:$0xff]
    %v71 = vld [vmem:[%s0 + $0x1c8] sm:$0xff]
    %v72 = vld [vmem:[%s0 + $0x1d0] sm:$0xff]
    %v73 = vld [vmem:[%s0 + $0x1d8] sm:$0xff]
    %v74 = vld [vmem:[%s0 + $0x1e0] sm:$0xff]
    %v75 = vld [vmem:[%s0 + $0x1e8] sm:$0xff]
    %v76 = vld [vmem:[%s0 + $0x1f0] sm:$0xff]
    %v77 = vld [vmem:[%s0 + $0x1f8] sm:$0xff]
    %v78 = vld [vmem:[%s1] sm:$0xff]
    %v79 = vld [vmem:[%s1 + $0x8] sm:$0xff]
    %v80 = vld [vmem:[%s1 + $0x10] sm:$0xff]
    %v81 = vld [vmem:[%s1 + $0x18] sm:$0xff]
    %v82 = vld [vmem:[%s1 + $0x20] sm:$0xff]
    %v83 = vld [vmem:[%s1 + $0x28] sm:$0xff]
    %v84 = vld [vmem:[%s1 + $0x30] sm:$0xff]
    %v85 = vld [vmem:[%s1 + $0x38] sm:$0xff]
    %v86 = vld [vmem:[%s1 + $0x40] sm:$0xff]
    %v87 = vld [vmem:[%s1 + $0x48] sm:$0xff]
    %v88 = vld [vmem:[%s1 + $0x50] sm:$0xff]
    %v89 = vld [vmem:[%s1 + $0x58] sm:$0xff]
    %v90 = vld [vmem:[%s1 + $0x60] sm:$0xff]
    %v91 = vld [vmem:[%s1 + $0x68] sm:$0xff]
    %v92 = vld [vmem:[%s1 + $0x70] sm:$0xff]
    %v93 = vld [vmem:[%s1 + $0x78] sm:$0xff]
    %v94 = vld [vmem:[%s1 + $0x80] sm:$0xff]
    %v95 = vld [vmem:[%s1 + $0x88] sm:$0xff]
    %v96 = vld [vmem:[%s1 + $0x90] sm:$0xff]
    %v97 = vld [vmem:[%s1 + $0x98] sm:$0xff]
    %v98 = vld [vmem:[%s1 + $0xa0] sm:$0xff]
    %v99 = vld [vmem:[%s1 + $0xa8] sm:$0xff]
    %v100 = vld [vmem:[%s1 + $0xb0] sm:$0xff]
    %v101 = vld [vmem:[%s1 + $0xb8] sm:$0xff]
    %v102 = vld [vmem:[%s1 + $0xc0] sm:$0xff]
    %v103 = vld [vmem:[%s1 + $0xc8] sm:$0xff]
    %v104 = vld [vmem:[%s1 + $0xd0] sm:$0xff]
    %v105 = vld [vmem:[%s1 + $0xd8] sm:$0xff]
    %v106 = vld [vmem:[%s1 + $0xe0] sm:$0xff]
    %v107 = vld [vmem:[%s1 + $0xe8] sm:$0xff]
    %v108 = vld [vmem:[%s1 + $0xf0] sm:$0xff]
    %v109 = vld [vmem:[%s1 + $0xf8] sm:$0xff]
    %v110 = vld [vmem:[%s1 + $0x100] sm:$0xff]
    %v111 = vld [vmem:[%s1 + $0x108] sm:$0xff]
    %v112 = vld [vmem:[%s1 + $0x110] sm:$0xff]
    %v113 = vld [vmem:[%s1 + $0x118] sm:$0xff]
    %v114 = vld [vmem:[%s1 + $0x120] sm:$0xff]
    %v115 = vld [vmem:[%s1 + $0x128] sm:$0xff]
    %v116 = vld [vmem:[%s1 + $0x130] sm:$0xff]
    %v117 = vld [vmem:[%s1 + $0x138] sm:$0xff]
    %v118 = vld [vmem:[%s1 + $0x140] sm:$0xff]
    %v119 = vld [vmem:[%s1 + $0x148] sm:$0xff]
    %v120 = vld [vmem:[%s1 + $0x150] sm:$0xff]
    %v121 = vld [vmem:[%s1 + $0x158] sm:$0xff]
    %v122 = vld [vmem:[%s1 + $0x160] sm:$0xff]
    %v123 = vld [vmem:[%s1 + $0x168] sm:$0xff]
    %v124 = vld [vmem:[%s1 + $0x170] sm:$0xff]
    %v125 = vld [vmem:[%s1 + $0x178] sm:$0xff]
    %v126 = vld [vmem:[%s1 + $0x180] sm:$0xff]
    %v127 = vld [vmem:[%s1 + $0x188] sm:$0xff]
    %v128 = vld [vmem:[%s1 + $0x190] sm:$0xff]
    %v129 = vld [vmem:[%s1 + $0x198] sm:$0xff]
    %v130 = vld [vmem:[%s1 + $0x1a0] sm:$0xff]
    %v131 = vld [vmem:[%s1 + $0x1a8] sm:$0xff]
    %v132 = vld [vmem:[%s1 + $0x1b0] sm:$0xff]
    %v133 = vld [vmem:[%s1 + $0x1b8] sm:$0xff]
    %v134 = vld [vmem:[%s1 + $0x1c0] sm:$0xff]
    %v135 = vld [vmem:[%s1 + $0x1c8] sm:$0xff]
    %v136 = vld [vmem:[%s1 + $0x1d0] sm:$0xff]
    %v137 = vld [vmem:[%s1 + $0x1d8] sm:$0xff]
    %v138 = vld [vmem:[%s1 + $0x1e0] sm:$0xff]
    %v139 = vld [vmem:[%s1 + $0x1e8] sm:$0xff]
    %v140 = vld [vmem:[%s1 + $0x1f0] sm:$0xff]
    %v141 = vld [vmem:[%s1 + $0x1f8] sm:$0xff]
    %vm142 = vcmp.lt.s32.totalorder %v78, 4
    %vm143 = vcmp.lt.s32.totalorder %v79, 4
    %vm144 = vcmp.lt.s32.totalorder %v80, 4
    %vm145 = vcmp.lt.s32.totalorder %v81, 4
    %vm146 = vcmp.lt.s32.totalorder %v82, 4
    %vm147 = vcmp.lt.s32.totalorder %v83, 4
    %vm148 = vcmp.lt.s32.totalorder %v84, 4
    %vm149 = vcmp.lt.s32.totalorder %v85, 4
    %vm150 = vcmp.lt.s32.totalorder %v86, 4
    %vm151 = vcmp.lt.s32.totalorder %v87, 4
    %vm152 = vcmp.lt.s32.totalorder %v88, 4
    %vm153 = vcmp.lt.s32.totalorder %v89, 4
    %vm154 = vcmp.lt.s32.totalorder %v90, 4
    %vm155 = vcmp.lt.s32.totalorder %v91, 4
    %vm156 = vcmp.lt.s32.totalorder %v92, 4
    %vm157 = vcmp.lt.s32.totalorder %v93, 4
    %vm158 = vcmp.lt.s32.totalorder %v94, 4
    %vm159 = vcmp.lt.s32.totalorder %v95, 4
    %vm160 = vcmp.lt.s32.totalorder %v96, 4
    %vm161 = vcmp.lt.s32.totalorder %v97, 4
    %vm162 = vcmp.lt.s32.totalorder %v98, 4
    %vm163 = vcmp.lt.s32.totalorder %v99, 4
    %vm164 = vcmp.lt.s32.totalorder %v100, 4
    %vm165 = vcmp.lt.s32.totalorder %v101, 4
    %vm166 = vcmp.lt.s32.totalorder %v102, 4
    %vm167 = vcmp.lt.s32.totalorder %v103, 4
    %vm168 = vcmp.lt.s32.totalorder %v104, 4
    %vm169 = vcmp.lt.s32.totalorder %v105, 4
    %vm170 = vcmp.lt.s32.totalorder %v106, 4
    %vm171 = vcmp.lt.s32.totalorder %v107, 4
    %vm172 = vcmp.lt.s32.totalorder %v108, 4
    %vm173 = vcmp.lt.s32.totalorder %v109, 4
    %vm174 = vcmp.lt.s32.totalorder %v110, 4
    %vm175 = vcmp.lt.s32.totalorder %v111, 4
    %vm176 = vcmp.lt.s32.totalorder %v112, 4
    %vm177 = vcmp.lt.s32.totalorder %v113, 4
    %vm178 = vcmp.lt.s32.totalorder %v114, 4
    %vm179 = vcmp.lt.s32.totalorder %v115, 4
    %vm180 = vcmp.lt.s32.totalorder %v116, 4
    %vm181 = vcmp.lt.s32.totalorder %v117, 4
    %vm182 = vcmp.lt.s32.totalorder %v118, 4
    %vm183 = vcmp.lt.s32.totalorder %v119, 4
    %vm184 = vcmp.lt.s32.totalorder %v120, 4
    %vm185 = vcmp.lt.s32.totalorder %v121, 4
    %vm186 = vcmp.lt.s32.totalorder %v122, 4
    %vm187 = vcmp.lt.s32.totalorder %v123, 4
    %vm188 = vcmp.lt.s32.totalorder %v124, 4
    %vm189 = vcmp.lt.s32.totalorder %v125, 4
    %vm190 = vcmp.lt.s32.totalorder %v126, 4
    %vm191 = vcmp.lt.s32.totalorder %v127, 4
    %vm192 = vcmp.lt.s32.totalorder %v128, 4
    %vm193 = vcmp.lt.s32.totalorder %v129, 4
    %vm194 = vcmp.lt.s32.totalorder %v130, 4
    %vm195 = vcmp.lt.s32.totalorder %v131, 4
    %vm196 = vcmp.lt.s32.totalorder %v132, 4
    %vm197 = vcmp.lt.s32.totalorder %v133, 4
    %vm198 = vcmp.lt.s32.totalorder %v134, 4
    %vm199 = vcmp.lt.s32.totalorder %v135, 4
    %vm200 = vcmp.lt.s32.totalorder %v136, 4
    %vm201 = vcmp.lt.s32.totalorder %v137, 4
    %vm202 = vcmp.lt.s32.totalorder %v138, 4
    %vm203 = vcmp.lt.s32.totalorder %v139, 4
    %vm204 = vcmp.lt.s32.totalorder %v140, 4
    %vm205 = vcmp.lt.s32.totalorder %v141, 4
    %v206 = vsel %vm142, 1, 0
    %v207 = vsel %vm143, 1, 0
    %v208 = vsel %vm144, 1, 0
    %v209 = vsel %vm145, 1, 0
    %v210 = vsel %vm146, 1, 0
    %v211 = vsel %vm147, 1, 0
    %v212 = vsel %vm148, 1, 0
    %v213 = vsel %vm149, 1, 0
    %v214 = vsel %vm150, 1, 0
    %v215 = vsel %vm151, 1, 0
    %v216 = vsel %vm152, 1, 0
    %v217 = vsel %vm153, 1, 0
    %v218 = vsel %vm154, 1, 0
    %v219 = vsel %vm155, 1, 0
    %v220 = vsel %vm156, 1, 0
    %v221 = vsel %vm157, 1, 0
    %v222 = vsel %vm158, 1, 0
    %v223 = vsel %vm159, 1, 0
    %v224 = vsel %vm160, 1, 0
    %v225 = vsel %vm161, 1, 0
    %v226 = vsel %vm162, 1, 0
    %v227 = vsel %vm163, 1, 0
    %v228 = vsel %vm164, 1, 0
    %v229 = vsel %vm165, 1, 0
    %v230 = vsel %vm166, 1, 0
    %v231 = vsel %vm167, 1, 0
    %v232 = vsel %vm168, 1, 0
    %v233 = vsel %vm169, 1, 0
    %v234 = vsel %vm170, 1, 0
    %v235 = vsel %vm171, 1, 0
    %v236 = vsel %vm172, 1, 0
    %v237 = vsel %vm173, 1, 0
    %v238 = vsel %vm174, 1, 0
    %v239 = vsel %vm175, 1, 0
    %v240 = vsel %vm176, 1, 0
    %v241 = vsel %vm177, 1, 0
    %v242 = vsel %vm178, 1, 0
    %v243 = vsel %vm179, 1, 0
    %v244 = vsel %vm180, 1, 0
    %v245 = vsel %vm181, 1, 0
    %v246 = vsel %vm182, 1, 0
    %v247 = vsel %vm183, 1, 0
    %v248 = vsel %vm184, 1, 0
    %v249 = vsel %vm185, 1, 0
    %v250 = vsel %vm186, 1, 0
    %v251 = vsel %vm187, 1, 0
    %v252 = vsel %vm188, 1, 0
    %v253 = vsel %vm189, 1, 0
    %v254 = vsel %vm190, 1, 0
    %v255 = vsel %vm191, 1, 0
    %v256 = vsel %vm192, 1, 0
    %v257 = vsel %vm193, 1, 0
    %v258 = vsel %vm194, 1, 0
    %v259 = vsel %vm195, 1, 0
    %v260 = vsel %vm196, 1, 0
    %v261 = vsel %vm197, 1, 0
    %v262 = vsel %vm198, 1, 0
    %v263 = vsel %vm199, 1, 0
    %v264 = vsel %vm200, 1, 0
    %v265 = vsel %vm201, 1, 0
    %v266 = vsel %vm202, 1, 0
    %v267 = vsel %vm203, 1, 0
    %v268 = vsel %vm204, 1, 0
    %v269 = vsel %vm205, 1, 0
    %v270 = vcvt.s32.f32 %v206
    %v271 = vcvt.s32.f32 %v207
    %v272 = vcvt.s32.f32 %v208
    %v273 = vcvt.s32.f32 %v209
    %v274 = vcvt.s32.f32 %v210
    %v275 = vcvt.s32.f32 %v211
    %v276 = vcvt.s32.f32 %v212
    %v277 = vcvt.s32.f32 %v213
    %v278 = vcvt.s32.f32 %v214
    %v279 = vcvt.s32.f32 %v215
    %v280 = vcvt.s32.f32 %v216
    %v281 = vcvt.s32.f32 %v217
    %v282 = vcvt.s32.f32 %v218
    %v283 = vcvt.s32.f32 %v219
    %v284 = vcvt.s32.f32 %v220
    %v285 = vcvt.s32.f32 %v221
    %v286 = vcvt.s32.f32 %v222
    %v287 = vcvt.s32.f32 %v223
    %v288 = vcvt.s32.f32 %v224
    %v289 = vcvt.s32.f32 %v225
    %v290 = vcvt.s32.f32 %v226
    %v291 = vcvt.s32.f32 %v227
    %v292 = vcvt.s32.f32 %v228
    %v293 = vcvt.s32.f32 %v229
    %v294 = vcvt.s32.f32 %v230
    %v295 = vcvt.s32.f32 %v231
    %v296 = vcvt.s32.f32 %v232
    %v297 = vcvt.s32.f32 %v233
    %v298 = vcvt.s32.f32 %v234
    %v299 = vcvt.s32.f32 %v235
    %v300 = vcvt.s32.f32 %v236
    %v301 = vcvt.s32.f32 %v237
    %v302 = vcvt.s32.f32 %v238
    %v303 = vcvt.s32.f32 %v239
    %v304 = vcvt.s32.f32 %v240
    %v305 = vcvt.s32.f32 %v241
    %v306 = vcvt.s32.f32 %v242
    %v307 = vcvt.s32.f32 %v243
    %v308 = vcvt.s32.f32 %v244
    %v309 = vcvt.s32.f32 %v245
    %v310 = vcvt.s32.f32 %v246
    %v311 = vcvt.s32.f32 %v247
    %v312 = vcvt.s32.f32 %v248
    %v313 = vcvt.s32.f32 %v249
    %v314 = vcvt.s32.f32 %v250
    %v315 = vcvt.s32.f32 %v251
    %v316 = vcvt.s32.f32 %v252
    %v317 = vcvt.s32.f32 %v253
    %v318 = vcvt.s32.f32 %v254
    %v319 = vcvt.s32.f32 %v255
    %v320 = vcvt.s32.f32 %v256
    %v321 = vcvt.s32.f32 %v257
    %v322 = vcvt.s32.f32 %v258
    %v323 = vcvt.s32.f32 %v259
    %v324 = vcvt.s32.f32 %v260
    %v325 = vcvt.s32.f32 %v261
    %v326 = vcvt.s32.f32 %v262
    %v327 = vcvt.s32.f32 %v263
    %v328 = vcvt.s32.f32 %v264
    %v329 = vcvt.s32.f32 %v265
    %v330 = vcvt.s32.f32 %v266
    %v331 = vcvt.s32.f32 %v267
    %v332 = vcvt.s32.f32 %v268
    %v333 = vcvt.s32.f32 %v269
    %vm334 = vcmask 31744
    %v335 = vsel %vm334, %v14, -inf
    %336 = vmax.xlane.f32.xlu0 %v335
    %v337 = vpop.xlane.xlu0 %336
    %v338 = vsel %vm334, %v15, -inf
    %339 = vmax.xlane.f32.xlu0 %v338
    %v340 = vpop.xlane.xlu0 %339
    %v341 = vsel %vm334, %v16, -inf
    %342 = vmax.xlane.f32.xlu0 %v341
    %v343 = vpop.xlane.xlu0 %342
    %v344 = vsel %vm334, %v17, -inf
    %345 = vmax.xlane.f32.xlu0 %v344
    %v346 = vpop.xlane.xlu0 %345
    %v347 = vsel %vm334, %v18, -inf
    %348 = vmax.xlane.f32.xlu0 %v347
    %v349 = vpop.xlane.xlu0 %348
    %v350 = vsel %vm334, %v19, -inf
    %351 = vmax.xlane.f32.xlu0 %v350
    %v352 = vpop.xlane.xlu0 %351
    %v353 = vsel %vm334, %v20, -inf
    %354 = vmax.xlane.f32.xlu0 %v353
    %v355 = vpop.xlane.xlu0 %354
    %v356 = vsel %vm334, %v21, -inf
    %357 = vmax.xlane.f32.xlu0 %v356
    %v358 = vpop.xlane.xlu0 %357
    %v359 = vsel %vm334, %v22, -inf
    %360 = vmax.xlane.f32.xlu0 %v359
    %v361 = vpop.xlane.xlu0 %360
    %v362 = vsel %vm334, %v23, -inf
    %363 = vmax.xlane.f32.xlu0 %v362
    %v364 = vpop.xlane.xlu0 %363
    %v365 = vsel %vm334, %v24, -inf
    %366 = vmax.xlane.f32.xlu0 %v365
    %v367 = vpop.xlane.xlu0 %366
    %v368 = vsel %vm334, %v25, -inf
    %369 = vmax.xlane.f32.xlu0 %v368
    %v370 = vpop.xlane.xlu0 %369
    %v371 = vsel %vm334, %v26, -inf
    %372 = vmax.xlane.f32.xlu0 %v371
    %v373 = vpop.xlane.xlu0 %372
    %v374 = vsel %vm334, %v27, -inf
    %375 = vmax.xlane.f32.xlu0 %v374
    %v376 = vpop.xlane.xlu0 %375
    %v377 = vsel %vm334, %v28, -inf
    %378 = vmax.xlane.f32.xlu0 %v377
    %v379 = vpop.xlane.xlu0 %378
    %v380 = vsel %vm334, %v29, -inf
    %381 = vmax.xlane.f32.xlu0 %v380
    %v382 = vpop.xlane.xlu0 %381
    %v383 = vsel %vm334, %v30, -inf
    %384 = vmax.xlane.f32.xlu0 %v383
    %v385 = vpop.xlane.xlu0 %384
    %v386 = vsel %vm334, %v31, -inf
    %387 = vmax.xlane.f32.xlu0 %v386
    %v388 = vpop.xlane.xlu0 %387
    %v389 = vsel %vm334, %v32, -inf
    %390 = vmax.xlane.f32.xlu0 %v389
    %v391 = vpop.xlane.xlu0 %390
    %v392 = vsel %vm334, %v33, -inf
    %393 = vmax.xlane.f32.xlu0 %v392
    %v394 = vpop.xlane.xlu0 %393
    %v395 = vsel %vm334, %v34, -inf
    %396 = vmax.xlane.f32.xlu0 %v395
    %v397 = vpop.xlane.xlu0 %396
    %v398 = vsel %vm334, %v35, -inf
    %399 = vmax.xlane.f32.xlu0 %v398
    %v400 = vpop.xlane.xlu0 %399
    %v401 = vsel %vm334, %v36, -inf
    %402 = vmax.xlane.f32.xlu0 %v401
    %v403 = vpop.xlane.xlu0 %402
    %v404 = vsel %vm334, %v37, -inf
    %405 = vmax.xlane.f32.xlu0 %v404
    %v406 = vpop.xlane.xlu0 %405
    %v407 = vsel %vm334, %v38, -inf
    %408 = vmax.xlane.f32.xlu0 %v407
    %v409 = vpop.xlane.xlu0 %408
    %v410 = vsel %vm334, %v39, -inf
    %411 = vmax.xlane.f32.xlu0 %v410
    %v412 = vpop.xlane.xlu0 %411
    %v413 = vsel %vm334, %v40, -inf
    %414 = vmax.xlane.f32.xlu0 %v413
    %v415 = vpop.xlane.xlu0 %414
    %v416 = vsel %vm334, %v41, -inf
    %417 = vmax.xlane.f32.xlu0 %v416
    %v418 = vpop.xlane.xlu0 %417
    %v419 = vsel %vm334, %v42, -inf
    %420 = vmax.xlane.f32.xlu0 %v419
    %v421 = vpop.xlane.xlu0 %420
    %v422 = vsel %vm334, %v43, -inf
    %423 = vmax.xlane.f32.xlu0 %v422
    %v424 = vpop.xlane.xlu0 %423
    %v425 = vsel %vm334, %v44, -inf
    %426 = vmax.xlane.f32.xlu0 %v425
    %v427 = vpop.xlane.xlu0 %426
    %v428 = vsel %vm334, %v45, -inf
    %429 = vmax.xlane.f32.xlu0 %v428
    %v430 = vpop.xlane.xlu0 %429
    %v431 = vsel %vm334, %v46, -inf
    %432 = vmax.xlane.f32.xlu0 %v431
    %v433 = vpop.xlane.xlu0 %432
    %v434 = vsel %vm334, %v47, -inf
    %435 = vmax.xlane.f32.xlu0 %v434
    %v436 = vpop.xlane.xlu0 %435
    %v437 = vsel %vm334, %v48, -inf
    %438 = vmax.xlane.f32.xlu0 %v437
    %v439 = vpop.xlane.xlu0 %438
    %v440 = vsel %vm334, %v49, -inf
    %441 = vmax.xlane.f32.xlu0 %v440
    %v442 = vpop.xlane.xlu0 %441
    %v443 = vsel %vm334, %v50, -inf
    %444 = vmax.xlane.f32.xlu0 %v443
    %v445 = vpop.xlane.xlu0 %444
    %v446 = vsel %vm334, %v51, -inf
    %447 = vmax.xlane.f32.xlu0 %v446
    %v448 = vpop.xlane.xlu0 %447
    %v449 = vsel %vm334, %v52, -inf
    %450 = vmax.xlane.f32.xlu0 %v449
    %v451 = vpop.xlane.xlu0 %450
    %v452 = vsel %vm334, %v53, -inf
    %453 = vmax.xlane.f32.xlu0 %v452
    %v454 = vpop.xlane.xlu0 %453
    %v455 = vsel %vm334, %v54, -inf
    %456 = vmax.xlane.f32.xlu0 %v455
    %v457 = vpop.xlane.xlu0 %456
    %v458 = vsel %vm334, %v55, -inf
    %459 = vmax.xlane.f32.xlu0 %v458
    %v460 = vpop.xlane.xlu0 %459
    %v461 = vsel %vm334, %v56, -inf
    %462 = vmax.xlane.f32.xlu0 %v461
    %v463 = vpop.xlane.xlu0 %462
    %v464 = vsel %vm334, %v57, -inf
    %465 = vmax.xlane.f32.xlu0 %v464
    %v466 = vpop.xlane.xlu0 %465
    %v467 = vsel %vm334, %v58, -inf
    %468 = vmax.xlane.f32.xlu0 %v467
    %v469 = vpop.xlane.xlu0 %468
    %v470 = vsel %vm334, %v59, -inf
    %471 = vmax.xlane.f32.xlu0 %v470
    %v472 = vpop.xlane.xlu0 %471
    %v473 = vsel %vm334, %v60, -inf
    %474 = vmax.xlane.f32.xlu0 %v473
    %v475 = vpop.xlane.xlu0 %474
    %v476 = vsel %vm334, %v61, -inf
    %477 = vmax.xlane.f32.xlu0 %v476
    %v478 = vpop.xlane.xlu0 %477
    %v479 = vsel %vm334, %v62, -inf
    %480 = vmax.xlane.f32.xlu0 %v479
    %v481 = vpop.xlane.xlu0 %480
    %v482 = vsel %vm334, %v63, -inf
    %483 = vmax.xlane.f32.xlu0 %v482
    %v484 = vpop.xlane.xlu0 %483
    %v485 = vsel %vm334, %v64, -inf
    %486 = vmax.xlane.f32.xlu0 %v485
    %v487 = vpop.xlane.xlu0 %486
    %v488 = vsel %vm334, %v65, -inf
    %489 = vmax.xlane.f32.xlu0 %v488
    %v490 = vpop.xlane.xlu0 %489
    %v491 = vsel %vm334, %v66, -inf
    %492 = vmax.xlane.f32.xlu0 %v491
    %v493 = vpop.xlane.xlu0 %492
    %v494 = vsel %vm334, %v67, -inf
    %495 = vmax.xlane.f32.xlu0 %v494
    %v496 = vpop.xlane.xlu0 %495
    %v497 = vsel %vm334, %v68, -inf
    %498 = vmax.xlane.f32.xlu0 %v497
    %v499 = vpop.xlane.xlu0 %498
    %v500 = vsel %vm334, %v69, -inf
    %501 = vmax.xlane.f32.xlu0 %v500
    %v502 = vpop.xlane.xlu0 %501
    %v503 = vsel %vm334, %v70, -inf
    %504 = vmax.xlane.f32.xlu0 %v503
    %v505 = vpop.xlane.xlu0 %504
    %v506 = vsel %vm334, %v71, -inf
    %507 = vmax.xlane.f32.xlu0 %v506
    %v508 = vpop.xlane.xlu0 %507
    %v509 = vsel %vm334, %v72, -inf
    %510 = vmax.xlane.f32.xlu0 %v509
    %v511 = vpop.xlane.xlu0 %510
    %v512 = vsel %vm334, %v73, -inf
    %513 = vmax.xlane.f32.xlu0 %v512
    %v514 = vpop.xlane.xlu0 %513
    %v515 = vsel %vm334, %v74, -inf
    %516 = vmax.xlane.f32.xlu0 %v515
    %v517 = vpop.xlane.xlu0 %516
    %v518 = vsel %vm334, %v75, -inf
    %519 = vmax.xlane.f32.xlu0 %v518
    %v520 = vpop.xlane.xlu0 %519
    %v521 = vsel %vm334, %v76, -inf
    %522 = vmax.xlane.f32.xlu0 %v521
    %v523 = vpop.xlane.xlu0 %522
    %v524 = vsel %vm334, %v77, -inf
    %525 = vmax.xlane.f32.xlu0 %v524
    %v526 = vpop.xlane.xlu0 %525
    %v527 = vsub.f32 %v14, %v337
    %v528 = vsub.f32 %v15, %v340
    %v529 = vsub.f32 %v16, %v343
    %v530 = vsub.f32 %v17, %v346
    %v531 = vsub.f32 %v18, %v349
    %v532 = vsub.f32 %v19, %v352
    %v533 = vsub.f32 %v20, %v355
    %v534 = vsub.f32 %v21, %v358
    %v535 = vsub.f32 %v22, %v361
    %v536 = vsub.f32 %v23, %v364
    %v537 = vsub.f32 %v24, %v367
    %v538 = vsub.f32 %v25, %v370
    %v539 = vsub.f32 %v26, %v373
    %v540 = vsub.f32 %v27, %v376
    %v541 = vsub.f32 %v28, %v379
    %v542 = vsub.f32 %v29, %v382
    %v543 = vsub.f32 %v30, %v385
    %v544 = vsub.f32 %v31, %v388
    %v545 = vsub.f32 %v32, %v391
    %v546 = vsub.f32 %v33, %v394
    %v547 = vsub.f32 %v34, %v397
    %v548 = vsub.f32 %v35, %v400
    %v549 = vsub.f32 %v36, %v403
    %v550 = vsub.f32 %v37, %v406
    %v551 = vsub.f32 %v38, %v409
    %v552 = vsub.f32 %v39, %v412
    %v553 = vsub.f32 %v40, %v415
    %v554 = vsub.f32 %v41, %v418
    %v555 = vsub.f32 %v42, %v421
    %v556 = vsub.f32 %v43, %v424
    %v557 = vsub.f32 %v44, %v427
    %v558 = vsub.f32 %v45, %v430
    %v559 = vsub.f32 %v46, %v433
    %v560 = vsub.f32 %v47, %v436
    %v561 = vsub.f32 %v48, %v439
    %v562 = vsub.f32 %v49, %v442
    %v563 = vsub.f32 %v50, %v445
    %v564 = vsub.f32 %v51, %v448
    %v565 = vsub.f32 %v52, %v451
    %v566 = vsub.f32 %v53, %v454
    %v567 = vsub.f32 %v54, %v457
    %v568 = vsub.f32 %v55, %v460
    %v569 = vsub.f32 %v56, %v463
    %v570 = vsub.f32 %v57, %v466
    %v571 = vsub.f32 %v58, %v469
    %v572 = vsub.f32 %v59, %v472
    %v573 = vsub.f32 %v60, %v475
    %v574 = vsub.f32 %v61, %v478
    %v575 = vsub.f32 %v62, %v481
    %v576 = vsub.f32 %v63, %v484
    %v577 = vsub.f32 %v64, %v487
    %v578 = vsub.f32 %v65, %v490
    %v579 = vsub.f32 %v66, %v493
    %v580 = vsub.f32 %v67, %v496
    %v581 = vsub.f32 %v68, %v499
    %v582 = vsub.f32 %v69, %v502
    %v583 = vsub.f32 %v70, %v505
    %v584 = vsub.f32 %v71, %v508
    %v585 = vsub.f32 %v72, %v511
    %v586 = vsub.f32 %v73, %v514
    %v587 = vsub.f32 %v74, %v517
    %v588 = vsub.f32 %v75, %v520
    %v589 = vsub.f32 %v76, %v523
    %v590 = vsub.f32 %v77, %v526
    %v591 = vmul.f32 %v527, 1.442695
    %v592 = vpow.pop %v591
    %v593 = vmul.f32 %v528, 1.442695
    %v594 = vpow.pop %v593
    %v595 = vmul.f32 %v529, 1.442695
    %v596 = vpow.pop %v595
    %v597 = vmul.f32 %v530, 1.442695
    %v598 = vpow.pop %v597
    %v599 = vmul.f32 %v531, 1.442695
    %v600 = vpow.pop %v599
    %v601 = vmul.f32 %v532, 1.442695
    %v602 = vpow.pop %v601
    %v603 = vmul.f32 %v533, 1.442695
    %v604 = vpow.pop %v603
    %v605 = vmul.f32 %v534, 1.442695
    %v606 = vpow.pop %v605
    %v607 = vmul.f32 %v535, 1.442695
    %v608 = vpow.pop %v607
    %v609 = vmul.f32 %v536, 1.442695
    %v610 = vpow.pop %v609
    %v611 = vmul.f32 %v537, 1.442695
    %v612 = vpow.pop %v611
    %v613 = vmul.f32 %v538, 1.442695
    %v614 = vpow.pop %v613
    %v615 = vmul.f32 %v539, 1.442695
    %v616 = vpow.pop %v615
    %v617 = vmul.f32 %v540, 1.442695
    %v618 = vpow.pop %v617
    %v619 = vmul.f32 %v541, 1.442695
    %v620 = vpow.pop %v619
    %v621 = vmul.f32 %v542, 1.442695
    %v622 = vpow.pop %v621
    %v623 = vmul.f32 %v543, 1.442695
    %v624 = vpow.pop %v623
    %v625 = vmul.f32 %v544, 1.442695
    %v626 = vpow.pop %v625
    %v627 = vmul.f32 %v545, 1.442695
    %v628 = vpow.pop %v627
    %v629 = vmul.f32 %v546, 1.442695
    %v630 = vpow.pop %v629
    %v631 = vmul.f32 %v547, 1.442695
    %v632 = vpow.pop %v631
    %v633 = vmul.f32 %v548, 1.442695
    %v634 = vpow.pop %v633
    %v635 = vmul.f32 %v549, 1.442695
    %v636 = vpow.pop %v635
    %v637 = vmul.f32 %v550, 1.442695
    %v638 = vpow.pop %v637
    %v639 = vmul.f32 %v551, 1.442695
    %v640 = vpow.pop %v639
    %v641 = vmul.f32 %v552, 1.442695
    %v642 = vpow.pop %v641
    %v643 = vmul.f32 %v553, 1.442695
    %v644 = vpow.pop %v643
    %v645 = vmul.f32 %v554, 1.442695
    %v646 = vpow.pop %v645
    %v647 = vmul.f32 %v555, 1.442695
    %v648 = vpow.pop %v647
    %v649 = vmul.f32 %v556, 1.442695
    %v650 = vpow.pop %v649
    %v651 = vmul.f32 %v557, 1.442695
    %v652 = vpow.pop %v651
    %v653 = vmul.f32 %v558, 1.442695
    %v654 = vpow.pop %v653
    %v655 = vmul.f32 %v559, 1.442695
    %v656 = vpow.pop %v655
    %v657 = vmul.f32 %v560, 1.442695
    %v658 = vpow.pop %v657
    %v659 = vmul.f32 %v561, 1.442695
    %v660 = vpow.pop %v659
    %v661 = vmul.f32 %v562, 1.442695
    %v662 = vpow.pop %v661
    %v663 = vmul.f32 %v563, 1.442695
    %v664 = vpow.pop %v663
    %v665 = vmul.f32 %v564, 1.442695
    %v666 = vpow.pop %v665
    %v667 = vmul.f32 %v565, 1.442695
    %v668 = vpow.pop %v667
    %v669 = vmul.f32 %v566, 1.442695
    %v670 = vpow.pop %v669
    %v671 = vmul.f32 %v567, 1.442695
    %v672 = vpow.pop %v671
    %v673 = vmul.f32 %v568, 1.442695
    %v674 = vpow.pop %v673
    %v675 = vmul.f32 %v569, 1.442695
    %v676 = vpow.pop %v675
    %v677 = vmul.f32 %v570, 1.442695
    %v678 = vpow.pop %v677
    %v679 = vmul.f32 %v571, 1.442695
    %v680 = vpow.pop %v679
    %v681 = vmul.f32 %v572, 1.442695
    %v682 = vpow.pop %v681
    %v683 = vmul.f32 %v573, 1.442695
    %v684 = vpow.pop %v683
    %v685 = vmul.f32 %v574, 1.442695
    %v686 = vpow.pop %v685
    %v687 = vmul.f32 %v575, 1.442695
    %v688 = vpow.pop %v687
    %v689 = vmul.f32 %v576, 1.442695
    %v690 = vpow.pop %v689
    %v691 = vmul.f32 %v577, 1.442695
    %v692 = vpow.pop %v691
    %v693 = vmul.f32 %v578, 1.442695
    %v694 = vpow.pop %v693
    %v695 = vmul.f32 %v579, 1.442695
    %v696 = vpow.pop %v695
    %v697 = vmul.f32 %v580, 1.442695
    %v698 = vpow.pop %v697
    %v699 = vmul.f32 %v581, 1.442695
    %v700 = vpow.pop %v699
    %v701 = vmul.f32 %v582, 1.442695
    %v702 = vpow.pop %v701
    %v703 = vmul.f32 %v583, 1.442695
    %v704 = vpow.pop %v703
    %v705 = vmul.f32 %v584, 1.442695
    %v706 = vpow.pop %v705
    %v707 = vmul.f32 %v585, 1.442695
    %v708 = vpow.pop %v707
    %v709 = vmul.f32 %v586, 1.442695
    %v710 = vpow.pop %v709
    %v711 = vmul.f32 %v587, 1.442695
    %v712 = vpow.pop %v711
    %v713 = vmul.f32 %v588, 1.442695
    %v714 = vpow.pop %v713
    %v715 = vmul.f32 %v589, 1.442695
    %v716 = vpow.pop %v715
    %v717 = vmul.f32 %v590, 1.442695
    %v718 = vpow.pop %v717
    %v719 = vsel %vm334, %v592, 0.0
    %720 = vadd.xlane.f32.xlu0 %v719
    %v721 = vpop.xlane.xlu0 %720
    %v722 = vsel %vm334, %v594, 0.0
    %723 = vadd.xlane.f32.xlu0 %v722
    %v724 = vpop.xlane.xlu0 %723
    %v725 = vsel %vm334, %v596, 0.0
    %726 = vadd.xlane.f32.xlu0 %v725
    %v727 = vpop.xlane.xlu0 %726
    %v728 = vsel %vm334, %v598, 0.0
    %729 = vadd.xlane.f32.xlu0 %v728
    %v730 = vpop.xlane.xlu0 %729
    %v731 = vsel %vm334, %v600, 0.0
    %732 = vadd.xlane.f32.xlu0 %v731
    %v733 = vpop.xlane.xlu0 %732
    %v734 = vsel %vm334, %v602, 0.0
    %735 = vadd.xlane.f32.xlu0 %v734
    %v736 = vpop.xlane.xlu0 %735
    %v737 = vsel %vm334, %v604, 0.0
    %738 = vadd.xlane.f32.xlu0 %v737
    %v739 = vpop.xlane.xlu0 %738
    %v740 = vsel %vm334, %v606, 0.0
    %741 = vadd.xlane.f32.xlu0 %v740
    %v742 = vpop.xlane.xlu0 %741
    %v743 = vsel %vm334, %v608, 0.0
    %744 = vadd.xlane.f32.xlu0 %v743
    %v745 = vpop.xlane.xlu0 %744
    %v746 = vsel %vm334, %v610, 0.0
    %747 = vadd.xlane.f32.xlu0 %v746
    %v748 = vpop.xlane.xlu0 %747
    %v749 = vsel %vm334, %v612, 0.0
    %750 = vadd.xlane.f32.xlu0 %v749
    %v751 = vpop.xlane.xlu0 %750
    %v752 = vsel %vm334, %v614, 0.0
    %753 = vadd.xlane.f32.xlu0 %v752
    %v754 = vpop.xlane.xlu0 %753
    %v755 = vsel %vm334, %v616, 0.0
    %756 = vadd.xlane.f32.xlu0 %v755
    %v757 = vpop.xlane.xlu0 %756
    %v758 = vsel %vm334, %v618, 0.0
    %759 = vadd.xlane.f32.xlu0 %v758
    %v760 = vpop.xlane.xlu0 %759
    %v761 = vsel %vm334, %v620, 0.0
    %762 = vadd.xlane.f32.xlu0 %v761
    %v763 = vpop.xlane.xlu0 %762
    %v764 = vsel %vm334, %v622, 0.0
    %765 = vadd.xlane.f32.xlu0 %v764
    %v766 = vpop.xlane.xlu0 %765
    %v767 = vsel %vm334, %v624, 0.0
    %768 = vadd.xlane.f32.xlu0 %v767
    %v769 = vpop.xlane.xlu0 %768
    %v770 = vsel %vm334, %v626, 0.0
    %771 = vadd.xlane.f32.xlu0 %v770
    %v772 = vpop.xlane.xlu0 %771
    %v773 = vsel %vm334, %v628, 0.0
    %774 = vadd.xlane.f32.xlu0 %v773
    %v775 = vpop.xlane.xlu0 %774
    %v776 = vsel %vm334, %v630, 0.0
    %777 = vadd.xlane.f32.xlu0 %v776
    %v778 = vpop.xlane.xlu0 %777
    %v779 = vsel %vm334, %v632, 0.0
    %780 = vadd.xlane.f32.xlu0 %v779
    %v781 = vpop.xlane.xlu0 %780
    %v782 = vsel %vm334, %v634, 0.0
    %783 = vadd.xlane.f32.xlu0 %v782
    %v784 = vpop.xlane.xlu0 %783
    %v785 = vsel %vm334, %v636, 0.0
    %786 = vadd.xlane.f32.xlu0 %v785
    %v787 = vpop.xlane.xlu0 %786
    %v788 = vsel %vm334, %v638, 0.0
    %789 = vadd.xlane.f32.xlu0 %v788
    %v790 = vpop.xlane.xlu0 %789
    %v791 = vsel %vm334, %v640, 0.0
    %792 = vadd.xlane.f32.xlu0 %v791
    %v793 = vpop.xlane.xlu0 %792
    %v794 = vsel %vm334, %v642, 0.0
    %795 = vadd.xlane.f32.xlu0 %v794
    %v796 = vpop.xlane.xlu0 %795
    %v797 = vsel %vm334, %v644, 0.0
    %798 = vadd.xlane.f32.xlu0 %v797
    %v799 = vpop.xlane.xlu0 %798
    %v800 = vsel %vm334, %v646, 0.0
    %801 = vadd.xlane.f32.xlu0 %v800
    %v802 = vpop.xlane.xlu0 %801
    %v803 = vsel %vm334, %v648, 0.0
    %804 = vadd.xlane.f32.xlu0 %v803
    %v805 = vpop.xlane.xlu0 %804
    %v806 = vsel %vm334, %v650, 0.0
    %807 = vadd.xlane.f32.xlu0 %v806
    %v808 = vpop.xlane.xlu0 %807
    %v809 = vsel %vm334, %v652, 0.0
    %810 = vadd.xlane.f32.xlu0 %v809
    %v811 = vpop.xlane.xlu0 %810
    %v812 = vsel %vm334, %v654, 0.0
    %813 = vadd.xlane.f32.xlu0 %v812
    %v814 = vpop.xlane.xlu0 %813
    %v815 = vsel %vm334, %v656, 0.0
    %816 = vadd.xlane.f32.xlu0 %v815
    %v817 = vpop.xlane.xlu0 %816
    %v818 = vsel %vm334, %v658, 0.0
    %819 = vadd.xlane.f32.xlu0 %v818
    %v820 = vpop.xlane.xlu0 %819
    %v821 = vsel %vm334, %v660, 0.0
    %822 = vadd.xlane.f32.xlu0 %v821
    %v823 = vpop.xlane.xlu0 %822
    %v824 = vsel %vm334, %v662, 0.0
    %825 = vadd.xlane.f32.xlu0 %v824
    %v826 = vpop.xlane.xlu0 %825
    %v827 = vsel %vm334, %v664, 0.0
    %828 = vadd.xlane.f32.xlu0 %v827
    %v829 = vpop.xlane.xlu0 %828
    %v830 = vsel %vm334, %v666, 0.0
    %831 = vadd.xlane.f32.xlu0 %v830
    %v832 = vpop.xlane.xlu0 %831
    %v833 = vsel %vm334, %v668, 0.0
    %834 = vadd.xlane.f32.xlu0 %v833
    %v835 = vpop.xlane.xlu0 %834
    %v836 = vsel %vm334, %v670, 0.0
    %837 = vadd.xlane.f32.xlu0 %v836
    %v838 = vpop.xlane.xlu0 %837
    %v839 = vsel %vm334, %v672, 0.0
    %840 = vadd.xlane.f32.xlu0 %v839
    %v841 = vpop.xlane.xlu0 %840
    %v842 = vsel %vm334, %v674, 0.0
    %843 = vadd.xlane.f32.xlu0 %v842
    %v844 = vpop.xlane.xlu0 %843
    %v845 = vsel %vm334, %v676, 0.0
    %846 = vadd.xlane.f32.xlu0 %v845
    %v847 = vpop.xlane.xlu0 %846
    %v848 = vsel %vm334, %v678, 0.0
    %849 = vadd.xlane.f32.xlu0 %v848
    %v850 = vpop.xlane.xlu0 %849
    %v851 = vsel %vm334, %v680, 0.0
    %852 = vadd.xlane.f32.xlu0 %v851
    %v853 = vpop.xlane.xlu0 %852
    %v854 = vsel %vm334, %v682, 0.0
    %855 = vadd.xlane.f32.xlu0 %v854
    %v856 = vpop.xlane.xlu0 %855
    %v857 = vsel %vm334, %v684, 0.0
    %858 = vadd.xlane.f32.xlu0 %v857
    %v859 = vpop.xlane.xlu0 %858
    %v860 = vsel %vm334, %v686, 0.0
    %861 = vadd.xlane.f32.xlu0 %v860
    %v862 = vpop.xlane.xlu0 %861
    %v863 = vsel %vm334, %v688, 0.0
    %864 = vadd.xlane.f32.xlu0 %v863
    %v865 = vpop.xlane.xlu0 %864
    %v866 = vsel %vm334, %v690, 0.0
    %867 = vadd.xlane.f32.xlu0 %v866
    %v868 = vpop.xlane.xlu0 %867
    %v869 = vsel %vm334, %v692, 0.0
    %870 = vadd.xlane.f32.xlu0 %v869
    %v871 = vpop.xlane.xlu0 %870
    %v872 = vsel %vm334, %v694, 0.0
    %873 = vadd.xlane.f32.xlu0 %v872
    %v874 = vpop.xlane.xlu0 %873
    %v875 = vsel %vm334, %v696, 0.0
    %876 = vadd.xlane.f32.xlu0 %v875
    %v877 = vpop.xlane.xlu0 %876
    %v878 = vsel %vm334, %v698, 0.0
    %879 = vadd.xlane.f32.xlu0 %v878
    %v880 = vpop.xlane.xlu0 %879
    %v881 = vsel %vm334, %v700, 0.0
    %882 = vadd.xlane.f32.xlu0 %v881
    %v883 = vpop.xlane.xlu0 %882
    %v884 = vsel %vm334, %v702, 0.0
    %885 = vadd.xlane.f32.xlu0 %v884
    %v886 = vpop.xlane.xlu0 %885
    %v887 = vsel %vm334, %v704, 0.0
    %888 = vadd.xlane.f32.xlu0 %v887
    %v889 = vpop.xlane.xlu0 %888
    %v890 = vsel %vm334, %v706, 0.0
    %891 = vadd.xlane.f32.xlu0 %v890
    %v892 = vpop.xlane.xlu0 %891
    %v893 = vsel %vm334, %v708, 0.0
    %894 = vadd.xlane.f32.xlu0 %v893
    %v895 = vpop.xlane.xlu0 %894
    %v896 = vsel %vm334, %v710, 0.0
    %897 = vadd.xlane.f32.xlu0 %v896
    %v898 = vpop.xlane.xlu0 %897
    %v899 = vsel %vm334, %v712, 0.0
    %900 = vadd.xlane.f32.xlu0 %v899
    %v901 = vpop.xlane.xlu0 %900
    %v902 = vsel %vm334, %v714, 0.0
    %903 = vadd.xlane.f32.xlu0 %v902
    %v904 = vpop.xlane.xlu0 %903
    %v905 = vsel %vm334, %v716, 0.0
    %906 = vadd.xlane.f32.xlu0 %v905
    %v907 = vpop.xlane.xlu0 %906
    %v908 = vsel %vm334, %v718, 0.0
    %909 = vadd.xlane.f32.xlu0 %v908
    %v910 = vpop.xlane.xlu0 %909
    %v911 = vlog2.pop %v721
    %v912 = vmul.f32 %v911, 0.6931472
    %v913 = vlog2.pop %v724
    %v914 = vmul.f32 %v913, 0.6931472
    %v915 = vlog2.pop %v727
    %v916 = vmul.f32 %v915, 0.6931472
    %v917 = vlog2.pop %v730
    %v918 = vmul.f32 %v917, 0.6931472
    %v919 = vlog2.pop %v733
    %v920 = vmul.f32 %v919, 0.6931472
    %v921 = vlog2.pop %v736
    %v922 = vmul.f32 %v921, 0.6931472
    %v923 = vlog2.pop %v739
    %v924 = vmul.f32 %v923, 0.6931472
    %v925 = vlog2.pop %v742
    %v926 = vmul.f32 %v925, 0.6931472
    %v927 = vlog2.pop %v745
    %v928 = vmul.f32 %v927, 0.6931472
    %v929 = vlog2.pop %v748
    %v930 = vmul.f32 %v929, 0.6931472
    %v931 = vlog2.pop %v751
    %v932 = vmul.f32 %v931, 0.6931472
    %v933 = vlog2.pop %v754
    %v934 = vmul.f32 %v933, 0.6931472
    %v935 = vlog2.pop %v757
    %v936 = vmul.f32 %v935, 0.6931472
    %v937 = vlog2.pop %v760
    %v938 = vmul.f32 %v937, 0.6931472
    %v939 = vlog2.pop %v763
    %v940 = vmul.f32 %v939, 0.6931472
    %v941 = vlog2.pop %v766
    %v942 = vmul.f32 %v941, 0.6931472
    %v943 = vlog2.pop %v769
    %v944 = vmul.f32 %v943, 0.6931472
    %v945 = vlog2.pop %v772
    %v946 = vmul.f32 %v945, 0.6931472
    %v947 = vlog2.pop %v775
    %v948 = vmul.f32 %v947, 0.6931472
    %v949 = vlog2.pop %v778
    %v950 = vmul.f32 %v949, 0.6931472
    %v951 = vlog2.pop %v781
    %v952 = vmul.f32 %v951, 0.6931472
    %v953 = vlog2.pop %v784
    %v954 = vmul.f32 %v953, 0.6931472
    %v955 = vlog2.pop %v787
    %v956 = vmul.f32 %v955, 0.6931472
    %v957 = vlog2.pop %v790
    %v958 = vmul.f32 %v957, 0.6931472
    %v959 = vlog2.pop %v793
    %v960 = vmul.f32 %v959, 0.6931472
    %v961 = vlog2.pop %v796
    %v962 = vmul.f32 %v961, 0.6931472
    %v963 = vlog2.pop %v799
    %v964 = vmul.f32 %v963, 0.6931472
    %v965 = vlog2.pop %v802
    %v966 = vmul.f32 %v965, 0.6931472
    %v967 = vlog2.pop %v805
    %v968 = vmul.f32 %v967, 0.6931472
    %v969 = vlog2.pop %v808
    %v970 = vmul.f32 %v969, 0.6931472
    %v971 = vlog2.pop %v811
    %v972 = vmul.f32 %v971, 0.6931472
    %v973 = vlog2.pop %v814
    %v974 = vmul.f32 %v973, 0.6931472
    %v975 = vlog2.pop %v817
    %v976 = vmul.f32 %v975, 0.6931472
    %v977 = vlog2.pop %v820
    %v978 = vmul.f32 %v977, 0.6931472
    %v979 = vlog2.pop %v823
    %v980 = vmul.f32 %v979, 0.6931472
    %v981 = vlog2.pop %v826
    %v982 = vmul.f32 %v981, 0.6931472
    %v983 = vlog2.pop %v829
    %v984 = vmul.f32 %v983, 0.6931472
    %v985 = vlog2.pop %v832
    %v986 = vmul.f32 %v985, 0.6931472
    %v987 = vlog2.pop %v835
    %v988 = vmul.f32 %v987, 0.6931472
    %v989 = vlog2.pop %v838
    %v990 = vmul.f32 %v989, 0.6931472
    %v991 = vlog2.pop %v841
    %v992 = vmul.f32 %v991, 0.6931472
    %v993 = vlog2.pop %v844
    %v994 = vmul.f32 %v993, 0.6931472
    %v995 = vlog2.pop %v847
    %v996 = vmul.f32 %v995, 0.6931472
    %v997 = vlog2.pop %v850
    %v998 = vmul.f32 %v997, 0.6931472
    %v999 = vlog2.pop %v853
    %v1000 = vmul.f32 %v999, 0.6931472
    %v1001 = vlog2.pop %v856
    %v1002 = vmul.f32 %v1001, 0.6931472
    %v1003 = vlog2.pop %v859
    %v1004 = vmul.f32 %v1003, 0.6931472
    %v1005 = vlog2.pop %v862
    %v1006 = vmul.f32 %v1005, 0.6931472
    %v1007 = vlog2.pop %v865
    %v1008 = vmul.f32 %v1007, 0.6931472
    %v1009 = vlog2.pop %v868
    %v1010 = vmul.f32 %v1009, 0.6931472
    %v1011 = vlog2.pop %v871
    %v1012 = vmul.f32 %v1011, 0.6931472
    %v1013 = vlog2.pop %v874
    %v1014 = vmul.f32 %v1013, 0.6931472
    %v1015 = vlog2.pop %v877
    %v1016 = vmul.f32 %v1015, 0.6931472
    %v1017 = vlog2.pop %v880
    %v1018 = vmul.f32 %v1017, 0.6931472
    %v1019 = vlog2.pop %v883
    %v1020 = vmul.f32 %v1019, 0.6931472
    %v1021 = vlog2.pop %v886
    %v1022 = vmul.f32 %v1021, 0.6931472
    %v1023 = vlog2.pop %v889
    %v1024 = vmul.f32 %v1023, 0.6931472
    %v1025 = vlog2.pop %v892
    %v1026 = vmul.f32 %v1025, 0.6931472
    %v1027 = vlog2.pop %v895
    %v1028 = vmul.f32 %v1027, 0.6931472
    %v1029 = vlog2.pop %v898
    %v1030 = vmul.f32 %v1029, 0.6931472
    %v1031 = vlog2.pop %v901
    %v1032 = vmul.f32 %v1031, 0.6931472
    %v1033 = vlog2.pop %v904
    %v1034 = vmul.f32 %v1033, 0.6931472
    %v1035 = vlog2.pop %v907
    %v1036 = vmul.f32 %v1035, 0.6931472
    %v1037 = vlog2.pop %v910
    %v1038 = vmul.f32 %v1037, 0.6931472
    %v1039 = vsub.f32 %v527, %v912
    %v1040 = vsub.f32 %v528, %v914
    %v1041 = vsub.f32 %v529, %v916
    %v1042 = vsub.f32 %v530, %v918
    %v1043 = vsub.f32 %v531, %v920
    %v1044 = vsub.f32 %v532, %v922
    %v1045 = vsub.f32 %v533, %v924
    %v1046 = vsub.f32 %v534, %v926
    %v1047 = vsub.f32 %v535, %v928
    %v1048 = vsub.f32 %v536, %v930
    %v1049 = vsub.f32 %v537, %v932
    %v1050 = vsub.f32 %v538, %v934
    %v1051 = vsub.f32 %v539, %v936
    %v1052 = vsub.f32 %v540, %v938
    %v1053 = vsub.f32 %v541, %v940
    %v1054 = vsub.f32 %v542, %v942
    %v1055 = vsub.f32 %v543, %v944
    %v1056 = vsub.f32 %v544, %v946
    %v1057 = vsub.f32 %v545, %v948
    %v1058 = vsub.f32 %v546, %v950
    %v1059 = vsub.f32 %v547, %v952
    %v1060 = vsub.f32 %v548, %v954
    %v1061 = vsub.f32 %v549, %v956
    %v1062 = vsub.f32 %v550, %v958
    %v1063 = vsub.f32 %v551, %v960
    %v1064 = vsub.f32 %v552, %v962
    %v1065 = vsub.f32 %v553, %v964
    %v1066 = vsub.f32 %v554, %v966
    %v1067 = vsub.f32 %v555, %v968
    %v1068 = vsub.f32 %v556, %v970
    %v1069 = vsub.f32 %v557, %v972
    %v1070 = vsub.f32 %v558, %v974
    %v1071 = vsub.f32 %v559, %v976
    %v1072 = vsub.f32 %v560, %v978
    %v1073 = vsub.f32 %v561, %v980
    %v1074 = vsub.f32 %v562, %v982
    %v1075 = vsub.f32 %v563, %v984
    %v1076 = vsub.f32 %v564, %v986
    %v1077 = vsub.f32 %v565, %v988
    %v1078 = vsub.f32 %v566, %v990
    %v1079 = vsub.f32 %v567, %v992
    %v1080 = vsub.f32 %v568, %v994
    %v1081 = vsub.f32 %v569, %v996
    %v1082 = vsub.f32 %v570, %v998
    %v1083 = vsub.f32 %v571, %v1000
    %v1084 = vsub.f32 %v572, %v1002
    %v1085 = vsub.f32 %v573, %v1004
    %v1086 = vsub.f32 %v574, %v1006
    %v1087 = vsub.f32 %v575, %v1008
    %v1088 = vsub.f32 %v576, %v1010
    %v1089 = vsub.f32 %v577, %v1012
    %v1090 = vsub.f32 %v578, %v1014
    %v1091 = vsub.f32 %v579, %v1016
    %v1092 = vsub.f32 %v580, %v1018
    %v1093 = vsub.f32 %v581, %v1020
    %v1094 = vsub.f32 %v582, %v1022
    %v1095 = vsub.f32 %v583, %v1024
    %v1096 = vsub.f32 %v584, %v1026
    %v1097 = vsub.f32 %v585, %v1028
    %v1098 = vsub.f32 %v586, %v1030
    %v1099 = vsub.f32 %v587, %v1032
    %v1100 = vsub.f32 %v588, %v1034
    %v1101 = vsub.f32 %v589, %v1036
    %v1102 = vsub.f32 %v590, %v1038
    %v1103 = vrcp.pop %v721
    %v1104 = vmul.f32 %v592, %v1103
    %v1105 = vrcp.pop %v724
    %v1106 = vmul.f32 %v594, %v1105
    %v1107 = vrcp.pop %v727
    %v1108 = vmul.f32 %v596, %v1107
    %v1109 = vrcp.pop %v730
    %v1110 = vmul.f32 %v598, %v1109
    %v1111 = vrcp.pop %v733
    %v1112 = vmul.f32 %v600, %v1111
    %v1113 = vrcp.pop %v736
    %v1114 = vmul.f32 %v602, %v1113
    %v1115 = vrcp.pop %v739
    %v1116 = vmul.f32 %v604, %v1115
    %v1117 = vrcp.pop %v742
    %v1118 = vmul.f32 %v606, %v1117
    %v1119 = vrcp.pop %v745
    %v1120 = vmul.f32 %v608, %v1119
    %v1121 = vrcp.pop %v748
    %v1122 = vmul.f32 %v610, %v1121
    %v1123 = vrcp.pop %v751
    %v1124 = vmul.f32 %v612, %v1123
    %v1125 = vrcp.pop %v754
    %v1126 = vmul.f32 %v614, %v1125
    %v1127 = vrcp.pop %v757
    %v1128 = vmul.f32 %v616, %v1127
    %v1129 = vrcp.pop %v760
    %v1130 = vmul.f32 %v618, %v1129
    %v1131 = vrcp.pop %v763
    %v1132 = vmul.f32 %v620, %v1131
    %v1133 = vrcp.pop %v766
    %v1134 = vmul.f32 %v622, %v1133
    %v1135 = vrcp.pop %v769
    %v1136 = vmul.f32 %v624, %v1135
    %v1137 = vrcp.pop %v772
    %v1138 = vmul.f32 %v626, %v1137
    %v1139 = vrcp.pop %v775
    %v1140 = vmul.f32 %v628, %v1139
    %v1141 = vrcp.pop %v778
    %v1142 = vmul.f32 %v630, %v1141
    %v1143 = vrcp.pop %v781
    %v1144 = vmul.f32 %v632, %v1143
    %v1145 = vrcp.pop %v784
    %v1146 = vmul.f32 %v634, %v1145
    %v1147 = vrcp.pop %v787
    %v1148 = vmul.f32 %v636, %v1147
    %v1149 = vrcp.pop %v790
    %v1150 = vmul.f32 %v638, %v1149
    %v1151 = vrcp.pop %v793
    %v1152 = vmul.f32 %v640, %v1151
    %v1153 = vrcp.pop %v796
    %v1154 = vmul.f32 %v642, %v1153
    %v1155 = vrcp.pop %v799
    %v1156 = vmul.f32 %v644, %v1155
    %v1157 = vrcp.pop %v802
    %v1158 = vmul.f32 %v646, %v1157
    %v1159 = vrcp.pop %v805
    %v1160 = vmul.f32 %v648, %v1159
    %v1161 = vrcp.pop %v808
    %v1162 = vmul.f32 %v650, %v1161
    %v1163 = vrcp.pop %v811
    %v1164 = vmul.f32 %v652, %v1163
    %v1165 = vrcp.pop %v814
    %v1166 = vmul.f32 %v654, %v1165
    %v1167 = vrcp.pop %v817
    %v1168 = vmul.f32 %v656, %v1167
    %v1169 = vrcp.pop %v820
    %v1170 = vmul.f32 %v658, %v1169
    %v1171 = vrcp.pop %v823
    %v1172 = vmul.f32 %v660, %v1171
    %v1173 = vrcp.pop %v826
    %v1174 = vmul.f32 %v662, %v1173
    %v1175 = vrcp.pop %v829
    %v1176 = vmul.f32 %v664, %v1175
    %v1177 = vrcp.pop %v832
    %v1178 = vmul.f32 %v666, %v1177
    %v1179 = vrcp.pop %v835
    %v1180 = vmul.f32 %v668, %v1179
    %v1181 = vrcp.pop %v838
    %v1182 = vmul.f32 %v670, %v1181
    %v1183 = vrcp.pop %v841
    %v1184 = vmul.f32 %v672, %v1183
    %v1185 = vrcp.pop %v844
    %v1186 = vmul.f32 %v674, %v1185
    %v1187 = vrcp.pop %v847
    %v1188 = vmul.f32 %v676, %v1187
    %v1189 = vrcp.pop %v850
    %v1190 = vmul.f32 %v678, %v1189
    %v1191 = vrcp.pop %v853
    %v1192 = vmul.f32 %v680, %v1191
    %v1193 = vrcp.pop %v856
    %v1194 = vmul.f32 %v682, %v1193
    %v1195 = vrcp.pop %v859
    %v1196 = vmul.f32 %v684, %v1195
    %v1197 = vrcp.pop %v862
    %v1198 = vmul.f32 %v686, %v1197
    %v1199 = vrcp.pop %v865
    %v1200 = vmul.f32 %v688, %v1199
    %v1201 = vrcp.pop %v868
    %v1202 = vmul.f32 %v690, %v1201
    %v1203 = vrcp.pop %v871
    %v1204 = vmul.f32 %v692, %v1203
    %v1205 = vrcp.pop %v874
    %v1206 = vmul.f32 %v694, %v1205
    %v1207 = vrcp.pop %v877
    %v1208 = vmul.f32 %v696, %v1207
    %v1209 = vrcp.pop %v880
    %v1210 = vmul.f32 %v698, %v1209
    %v1211 = vrcp.pop %v883
    %v1212 = vmul.f32 %v700, %v1211
    %v1213 = vrcp.pop %v886
    %v1214 = vmul.f32 %v702, %v1213
    %v1215 = vrcp.pop %v889
    %v1216 = vmul.f32 %v704, %v1215
    %v1217 = vrcp.pop %v892
    %v1218 = vmul.f32 %v706, %v1217
    %v1219 = vrcp.pop %v895
    %v1220 = vmul.f32 %v708, %v1219
    %v1221 = vrcp.pop %v898
    %v1222 = vmul.f32 %v710, %v1221
    %v1223 = vrcp.pop %v901
    %v1224 = vmul.f32 %v712, %v1223
    %v1225 = vrcp.pop %v904
    %v1226 = vmul.f32 %v714, %v1225
    %v1227 = vrcp.pop %v907
    %v1228 = vmul.f32 %v716, %v1227
    %v1229 = vrcp.pop %v910
    %v1230 = vmul.f32 %v718, %v1229
    %1232 = vset.pattern.permute.xlu0 0
    %1233 = vperm.xlu0 %1232, %v270
    %v1234 = vpop.permute.xlu0 %1233
    %1237 = vset.pattern.permute.xlu0 0
    %1238 = vperm.xlu0 %1237, %v271
    %v1239 = vpop.permute.xlu0 %1238
    %1242 = vset.pattern.permute.xlu0 0
    %1243 = vperm.xlu0 %1242, %v272
    %v1244 = vpop.permute.xlu0 %1243
    %1247 = vset.pattern.permute.xlu0 0
    %1248 = vperm.xlu0 %1247, %v273
    %v1249 = vpop.permute.xlu0 %1248
    %1252 = vset.pattern.permute.xlu0 0
    %1253 = vperm.xlu0 %1252, %v274
    %v1254 = vpop.permute.xlu0 %1253
    %1257 = vset.pattern.permute.xlu0 0
    %1258 = vperm.xlu0 %1257, %v275
    %v1259 = vpop.permute.xlu0 %1258
    %1262 = vset.pattern.permute.xlu0 0
    %1263 = vperm.xlu0 %1262, %v276
    %v1264 = vpop.permute.xlu0 %1263
    %1267 = vset.pattern.permute.xlu0 0
    %1268 = vperm.xlu0 %1267, %v277
    %v1269 = vpop.permute.xlu0 %1268
    %1272 = vset.pattern.permute.xlu0 0
    %1273 = vperm.xlu0 %1272, %v278
    %v1274 = vpop.permute.xlu0 %1273
    %1277 = vset.pattern.permute.xlu0 0
    %1278 = vperm.xlu0 %1277, %v279
    %v1279 = vpop.permute.xlu0 %1278
    %1282 = vset.pattern.permute.xlu0 0
    %1283 = vperm.xlu0 %1282, %v280
    %v1284 = vpop.permute.xlu0 %1283
    %1287 = vset.pattern.permute.xlu0 0
    %1288 = vperm.xlu0 %1287, %v281
    %v1289 = vpop.permute.xlu0 %1288
    %1292 = vset.pattern.permute.xlu0 0
    %1293 = vperm.xlu0 %1292, %v282
    %v1294 = vpop.permute.xlu0 %1293
    %1297 = vset.pattern.permute.xlu0 0
    %1298 = vperm.xlu0 %1297, %v283
    %v1299 = vpop.permute.xlu0 %1298
    %1302 = vset.pattern.permute.xlu0 0
    %1303 = vperm.xlu0 %1302, %v284
    %v1304 = vpop.permute.xlu0 %1303
    %1307 = vset.pattern.permute.xlu0 0
    %1308 = vperm.xlu0 %1307, %v285
    %v1309 = vpop.permute.xlu0 %1308
    %1312 = vset.pattern.permute.xlu0 0
    %1313 = vperm.xlu0 %1312, %v286
    %v1314 = vpop.permute.xlu0 %1313
    %1317 = vset.pattern.permute.xlu0 0
    %1318 = vperm.xlu0 %1317, %v287
    %v1319 = vpop.permute.xlu0 %1318
    %1322 = vset.pattern.permute.xlu0 0
    %1323 = vperm.xlu0 %1322, %v288
    %v1324 = vpop.permute.xlu0 %1323
    %1327 = vset.pattern.permute.xlu0 0
    %1328 = vperm.xlu0 %1327, %v289
    %v1329 = vpop.permute.xlu0 %1328
    %1332 = vset.pattern.permute.xlu0 0
    %1333 = vperm.xlu0 %1332, %v290
    %v1334 = vpop.permute.xlu0 %1333
    %1337 = vset.pattern.permute.xlu0 0
    %1338 = vperm.xlu0 %1337, %v291
    %v1339 = vpop.permute.xlu0 %1338
    %1342 = vset.pattern.permute.xlu0 0
    %1343 = vperm.xlu0 %1342, %v292
    %v1344 = vpop.permute.xlu0 %1343
    %1347 = vset.pattern.permute.xlu0 0
    %1348 = vperm.xlu0 %1347, %v293
    %v1349 = vpop.permute.xlu0 %1348
    %1352 = vset.pattern.permute.xlu0 0
    %1353 = vperm.xlu0 %1352, %v294
    %v1354 = vpop.permute.xlu0 %1353
    %1357 = vset.pattern.permute.xlu0 0
    %1358 = vperm.xlu0 %1357, %v295
    %v1359 = vpop.permute.xlu0 %1358
    %1362 = vset.pattern.permute.xlu0 0
    %1363 = vperm.xlu0 %1362, %v296
    %v1364 = vpop.permute.xlu0 %1363
    %1367 = vset.pattern.permute.xlu0 0
    %1368 = vperm.xlu0 %1367, %v297
    %v1369 = vpop.permute.xlu0 %1368
    %1372 = vset.pattern.permute.xlu0 0
    %1373 = vperm.xlu0 %1372, %v298
    %v1374 = vpop.permute.xlu0 %1373
    %1377 = vset.pattern.permute.xlu0 0
    %1378 = vperm.xlu0 %1377, %v299
    %v1379 = vpop.permute.xlu0 %1378
    %1382 = vset.pattern.permute.xlu0 0
    %1383 = vperm.xlu0 %1382, %v300
    %v1384 = vpop.permute.xlu0 %1383
    %1387 = vset.pattern.permute.xlu0 0
    %1388 = vperm.xlu0 %1387, %v301
    %v1389 = vpop.permute.xlu0 %1388
    %1392 = vset.pattern.permute.xlu0 0
    %1393 = vperm.xlu0 %1392, %v302
    %v1394 = vpop.permute.xlu0 %1393
    %1397 = vset.pattern.permute.xlu0 0
    %1398 = vperm.xlu0 %1397, %v303
    %v1399 = vpop.permute.xlu0 %1398
    %1402 = vset.pattern.permute.xlu0 0
    %1403 = vperm.xlu0 %1402, %v304
    %v1404 = vpop.permute.xlu0 %1403
    %1407 = vset.pattern.permute.xlu0 0
    %1408 = vperm.xlu0 %1407, %v305
    %v1409 = vpop.permute.xlu0 %1408
    %1412 = vset.pattern.permute.xlu0 0
    %1413 = vperm.xlu0 %1412, %v306
    %v1414 = vpop.permute.xlu0 %1413
    %1417 = vset.pattern.permute.xlu0 0
    %1418 = vperm.xlu0 %1417, %v307
    %v1419 = vpop.permute.xlu0 %1418
    %1422 = vset.pattern.permute.xlu0 0
    %1423 = vperm.xlu0 %1422, %v308
    %v1424 = vpop.permute.xlu0 %1423
    %1427 = vset.pattern.permute.xlu0 0
    %1428 = vperm.xlu0 %1427, %v309
    %v1429 = vpop.permute.xlu0 %1428
    %1432 = vset.pattern.permute.xlu0 0
    %1433 = vperm.xlu0 %1432, %v310
    %v1434 = vpop.permute.xlu0 %1433
    %1437 = vset.pattern.permute.xlu0 0
    %1438 = vperm.xlu0 %1437, %v311
    %v1439 = vpop.permute.xlu0 %1438
    %1442 = vset.pattern.permute.xlu0 0
    %1443 = vperm.xlu0 %1442, %v312
    %v1444 = vpop.permute.xlu0 %1443
    %1447 = vset.pattern.permute.xlu0 0
    %1448 = vperm.xlu0 %1447, %v313
    %v1449 = vpop.permute.xlu0 %1448
    %1452 = vset.pattern.permute.xlu0 0
    %1453 = vperm.xlu0 %1452, %v314
    %v1454 = vpop.permute.xlu0 %1453
    %1457 = vset.pattern.permute.xlu0 0
    %1458 = vperm.xlu0 %1457, %v315
    %v1459 = vpop.permute.xlu0 %1458
    %1462 = vset.pattern.permute.xlu0 0
    %1463 = vperm.xlu0 %1462, %v316
    %v1464 = vpop.permute.xlu0 %1463
    %1467 = vset.pattern.permute.xlu0 0
    %1468 = vperm.xlu0 %1467, %v317
    %v1469 = vpop.permute.xlu0 %1468
    %1472 = vset.pattern.permute.xlu0 0
    %1473 = vperm.xlu0 %1472, %v318
    %v1474 = vpop.permute.xlu0 %1473
    %1477 = vset.pattern.permute.xlu0 0
    %1478 = vperm.xlu0 %1477, %v319
    %v1479 = vpop.permute.xlu0 %1478
    %1482 = vset.pattern.permute.xlu0 0
    %1483 = vperm.xlu0 %1482, %v320
    %v1484 = vpop.permute.xlu0 %1483
    %1487 = vset.pattern.permute.xlu0 0
    %1488 = vperm.xlu0 %1487, %v321
    %v1489 = vpop.permute.xlu0 %1488
    %1492 = vset.pattern.permute.xlu0 0
    %1493 = vperm.xlu0 %1492, %v322
    %v1494 = vpop.permute.xlu0 %1493
    %1497 = vset.pattern.permute.xlu0 0
    %1498 = vperm.xlu0 %1497, %v323
    %v1499 = vpop.permute.xlu0 %1498
    %1502 = vset.pattern.permute.xlu0 0
    %1503 = vperm.xlu0 %1502, %v324
    %v1504 = vpop.permute.xlu0 %1503
    %1507 = vset.pattern.permute.xlu0 0
    %1508 = vperm.xlu0 %1507, %v325
    %v1509 = vpop.permute.xlu0 %1508
    %1512 = vset.pattern.permute.xlu0 0
    %1513 = vperm.xlu0 %1512, %v326
    %v1514 = vpop.permute.xlu0 %1513
    %1517 = vset.pattern.permute.xlu0 0
    %1518 = vperm.xlu0 %1517, %v327
    %v1519 = vpop.permute.xlu0 %1518
    %1522 = vset.pattern.permute.xlu0 0
    %1523 = vperm.xlu0 %1522, %v328
    %v1524 = vpop.permute.xlu0 %1523
    %1527 = vset.pattern.permute.xlu0 0
    %1528 = vperm.xlu0 %1527, %v329
    %v1529 = vpop.permute.xlu0 %1528
    %1532 = vset.pattern.permute.xlu0 0
    %1533 = vperm.xlu0 %1532, %v330
    %v1534 = vpop.permute.xlu0 %1533
    %1537 = vset.pattern.permute.xlu0 0
    %1538 = vperm.xlu0 %1537, %v331
    %v1539 = vpop.permute.xlu0 %1538
    %1542 = vset.pattern.permute.xlu0 0
    %1543 = vperm.xlu0 %1542, %v332
    %v1544 = vpop.permute.xlu0 %1543
    %1547 = vset.pattern.permute.xlu0 0
    %1548 = vperm.xlu0 %1547, %v333
    %v1549 = vpop.permute.xlu0 %1548
    %v1551 = vmul.f32 %v1104, %v1234
    %v1552 = vmul.f32 %v1106, %v1239
    %v1553 = vmul.f32 %v1108, %v1244
    %v1554 = vmul.f32 %v1110, %v1249
    %v1555 = vmul.f32 %v1112, %v1254
    %v1556 = vmul.f32 %v1114, %v1259
    %v1557 = vmul.f32 %v1116, %v1264
    %v1558 = vmul.f32 %v1118, %v1269
    %v1559 = vmul.f32 %v1120, %v1274
    %v1560 = vmul.f32 %v1122, %v1279
    %v1561 = vmul.f32 %v1124, %v1284
    %v1562 = vmul.f32 %v1126, %v1289
    %v1563 = vmul.f32 %v1128, %v1294
    %v1564 = vmul.f32 %v1130, %v1299
    %v1565 = vmul.f32 %v1132, %v1304
    %v1566 = vmul.f32 %v1134, %v1309
    %v1567 = vmul.f32 %v1136, %v1314
    %v1568 = vmul.f32 %v1138, %v1319
    %v1569 = vmul.f32 %v1140, %v1324
    %v1570 = vmul.f32 %v1142, %v1329
    %v1571 = vmul.f32 %v1144, %v1334
    %v1572 = vmul.f32 %v1146, %v1339
    %v1573 = vmul.f32 %v1148, %v1344
    %v1574 = vmul.f32 %v1150, %v1349
    %v1575 = vmul.f32 %v1152, %v1354
    %v1576 = vmul.f32 %v1154, %v1359
    %v1577 = vmul.f32 %v1156, %v1364
    %v1578 = vmul.f32 %v1158, %v1369
    %v1579 = vmul.f32 %v1160, %v1374
    %v1580 = vmul.f32 %v1162, %v1379
    %v1581 = vmul.f32 %v1164, %v1384
    %v1582 = vmul.f32 %v1166, %v1389
    %v1583 = vmul.f32 %v1168, %v1394
    %v1584 = vmul.f32 %v1170, %v1399
    %v1585 = vmul.f32 %v1172, %v1404
    %v1586 = vmul.f32 %v1174, %v1409
    %v1587 = vmul.f32 %v1176, %v1414
    %v1588 = vmul.f32 %v1178, %v1419
    %v1589 = vmul.f32 %v1180, %v1424
    %v1590 = vmul.f32 %v1182, %v1429
    %v1591 = vmul.f32 %v1184, %v1434
    %v1592 = vmul.f32 %v1186, %v1439
    %v1593 = vmul.f32 %v1188, %v1444
    %v1594 = vmul.f32 %v1190, %v1449
    %v1595 = vmul.f32 %v1192, %v1454
    %v1596 = vmul.f32 %v1194, %v1459
    %v1597 = vmul.f32 %v1196, %v1464
    %v1598 = vmul.f32 %v1198, %v1469
    %v1599 = vmul.f32 %v1200, %v1474
    %v1600 = vmul.f32 %v1202, %v1479
    %v1601 = vmul.f32 %v1204, %v1484
    %v1602 = vmul.f32 %v1206, %v1489
    %v1603 = vmul.f32 %v1208, %v1494
    %v1604 = vmul.f32 %v1210, %v1499
    %v1605 = vmul.f32 %v1212, %v1504
    %v1606 = vmul.f32 %v1214, %v1509
    %v1607 = vmul.f32 %v1216, %v1514
    %v1608 = vmul.f32 %v1218, %v1519
    %v1609 = vmul.f32 %v1220, %v1524
    %v1610 = vmul.f32 %v1222, %v1529
    %v1611 = vmul.f32 %v1224, %v1534
    %v1612 = vmul.f32 %v1226, %v1539
    %v1613 = vmul.f32 %v1228, %v1544
    %v1614 = vmul.f32 %v1230, %v1549
    %1615 = vst.msk [vmem:[%s2] sm:$0xff] %vm334, %v1551
    %1616 = vst.msk [vmem:[%s2 + $0x8] sm:$0xff] %vm334, %v1552
    %1617 = vst.msk [vmem:[%s2 + $0x10] sm:$0xff] %vm334, %v1553
    %1618 = vst.msk [vmem:[%s2 + $0x18] sm:$0xff] %vm334, %v1554
    %1619 = vst.msk [vmem:[%s2 + $0x20] sm:$0xff] %vm334, %v1555
    %1620 = vst.msk [vmem:[%s2 + $0x28] sm:$0xff] %vm334, %v1556
    %1621 = vst.msk [vmem:[%s2 + $0x30] sm:$0xff] %vm334, %v1557
    %1622 = vst.msk [vmem:[%s2 + $0x38] sm:$0xff] %vm334, %v1558
    %1623 = vst.msk [vmem:[%s2 + $0x40] sm:$0xff] %vm334, %v1559
    %1624 = vst.msk [vmem:[%s2 + $0x48] sm:$0xff] %vm334, %v1560
    %1625 = vst.msk [vmem:[%s2 + $0x50] sm:$0xff] %vm334, %v1561
    %1626 = vst.msk [vmem:[%s2 + $0x58] sm:$0xff] %vm334, %v1562
    %1627 = vst.msk [vmem:[%s2 + $0x60] sm:$0xff] %vm334, %v1563
    %1628 = vst.msk [vmem:[%s2 + $0x68] sm:$0xff] %vm334, %v1564
    %1629 = vst.msk [vmem:[%s2 + $0x70] sm:$0xff] %vm334, %v1565
    %1630 = vst.msk [vmem:[%s2 + $0x78] sm:$0xff] %vm334, %v1566
    %1631 = vst.msk [vmem:[%s2 + $0x80] sm:$0xff] %vm334, %v1567
    %1632 = vst.msk [vmem:[%s2 + $0x88] sm:$0xff] %vm334, %v1568
    %1633 = vst.msk [vmem:[%s2 + $0x90] sm:$0xff] %vm334, %v1569
    %1634 = vst.msk [vmem:[%s2 + $0x98] sm:$0xff] %vm334, %v1570
    %1635 = vst.msk [vmem:[%s2 + $0xa0] sm:$0xff] %vm334, %v1571
    %1636 = vst.msk [vmem:[%s2 + $0xa8] sm:$0xff] %vm334, %v1572
    %1637 = vst.msk [vmem:[%s2 + $0xb0] sm:$0xff] %vm334, %v1573
    %1638 = vst.msk [vmem:[%s2 + $0xb8] sm:$0xff] %vm334, %v1574
    %1639 = vst.msk [vmem:[%s2 + $0xc0] sm:$0xff] %vm334, %v1575
    %1640 = vst.msk [vmem:[%s2 + $0xc8] sm:$0xff] %vm334, %v1576
    %1641 = vst.msk [vmem:[%s2 + $0xd0] sm:$0xff] %vm334, %v1577
    %1642 = vst.msk [vmem:[%s2 + $0xd8] sm:$0xff] %vm334, %v1578
    %1643 = vst.msk [vmem:[%s2 + $0xe0] sm:$0xff] %vm334, %v1579
    %1644 = vst.msk [vmem:[%s2 + $0xe8] sm:$0xff] %vm334, %v1580
    %1645 = vst.msk [vmem:[%s2 + $0xf0] sm:$0xff] %vm334, %v1581
    %1646 = vst.msk [vmem:[%s2 + $0xf8] sm:$0xff] %vm334, %v1582
    %1647 = vst.msk [vmem:[%s2 + $0x100] sm:$0xff] %vm334, %v1583
    %1648 = vst.msk [vmem:[%s2 + $0x108] sm:$0xff] %vm334, %v1584
    %1649 = vst.msk [vmem:[%s2 + $0x110] sm:$0xff] %vm334, %v1585
    %1650 = vst.msk [vmem:[%s2 + $0x118] sm:$0xff] %vm334, %v1586
    %1651 = vst.msk [vmem:[%s2 + $0x120] sm:$0xff] %vm334, %v1587
    %1652 = vst.msk [vmem:[%s2 + $0x128] sm:$0xff] %vm334, %v1588
    %1653 = vst.msk [vmem:[%s2 + $0x130] sm:$0xff] %vm334, %v1589
    %1654 = vst.msk [vmem:[%s2 + $0x138] sm:$0xff] %vm334, %v1590
    %1655 = vst.msk [vmem:[%s2 + $0x140] sm:$0xff] %vm334, %v1591
    %1656 = vst.msk [vmem:[%s2 + $0x148] sm:$0xff] %vm334, %v1592
    %1657 = vst.msk [vmem:[%s2 + $0x150] sm:$0xff] %vm334, %v1593
    %1658 = vst.msk [vmem:[%s2 + $0x158] sm:$0xff] %vm334, %v1594
    %1659 = vst.msk [vmem:[%s2 + $0x160] sm:$0xff] %vm334, %v1595
    %1660 = vst.msk [vmem:[%s2 + $0x168] sm:$0xff] %vm334, %v1596
    %1661 = vst.msk [vmem:[%s2 + $0x170] sm:$0xff] %vm334, %v1597
    %1662 = vst.msk [vmem:[%s2 + $0x178] sm:$0xff] %vm334, %v1598
    %1663 = vst.msk [vmem:[%s2 + $0x180] sm:$0xff] %vm334, %v1599
    %1664 = vst.msk [vmem:[%s2 + $0x188] sm:$0xff] %vm334, %v1600
    %1665 = vst.msk [vmem:[%s2 + $0x190] sm:$0xff] %vm334, %v1601
    %1666 = vst.msk [vmem:[%s2 + $0x198] sm:$0xff] %vm334, %v1602
    %1667 = vst.msk [vmem:[%s2 + $0x1a0] sm:$0xff] %vm334, %v1603
    %1668 = vst.msk [vmem:[%s2 + $0x1a8] sm:$0xff] %vm334, %v1604
    %1669 = vst.msk [vmem:[%s2 + $0x1b0] sm:$0xff] %vm334, %v1605
    %1670 = vst.msk [vmem:[%s2 + $0x1b8] sm:$0xff] %vm334, %v1606
    %1671 = vst.msk [vmem:[%s2 + $0x1c0] sm:$0xff] %vm334, %v1607
    %1672 = vst.msk [vmem:[%s2 + $0x1c8] sm:$0xff] %vm334, %v1608
    %1673 = vst.msk [vmem:[%s2 + $0x1d0] sm:$0xff] %vm334, %v1609
    %1674 = vst.msk [vmem:[%s2 + $0x1d8] sm:$0xff] %vm334, %v1610
    %1675 = vst.msk [vmem:[%s2 + $0x1e0] sm:$0xff] %vm334, %v1611
    %1676 = vst.msk [vmem:[%s2 + $0x1e8] sm:$0xff] %vm334, %v1612
    %1677 = vst.msk [vmem:[%s2 + $0x1f0] sm:$0xff] %vm334, %v1613
    %1678 = vst.msk [vmem:[%s2 + $0x1f8] sm:$0xff] %vm334, %v1614
    %v1679 = vlaneseq
    %v1680 = vand.u32 %v1679, 127
    %1681 = vset.pattern.permute.xlu0 0
    %1682 = vperm.xlu0 %1681, %v78
    %v1683 = vpop.permute.xlu0 %1682
    %1684 = vset.pattern.permute.xlu0 0
    %1685 = vperm.xlu0 %1684, %v79
    %v1686 = vpop.permute.xlu0 %1685
    %1687 = vset.pattern.permute.xlu0 0
    %1688 = vperm.xlu0 %1687, %v80
    %v1689 = vpop.permute.xlu0 %1688
    %1690 = vset.pattern.permute.xlu0 0
    %1691 = vperm.xlu0 %1690, %v81
    %v1692 = vpop.permute.xlu0 %1691
    %1693 = vset.pattern.permute.xlu0 0
    %1694 = vperm.xlu0 %1693, %v82
    %v1695 = vpop.permute.xlu0 %1694
    %1696 = vset.pattern.permute.xlu0 0
    %1697 = vperm.xlu0 %1696, %v83
    %v1698 = vpop.permute.xlu0 %1697
    %1699 = vset.pattern.permute.xlu0 0
    %1700 = vperm.xlu0 %1699, %v84
    %v1701 = vpop.permute.xlu0 %1700
    %1702 = vset.pattern.permute.xlu0 0
    %1703 = vperm.xlu0 %1702, %v85
    %v1704 = vpop.permute.xlu0 %1703
    %1705 = vset.pattern.permute.xlu0 0
    %1706 = vperm.xlu0 %1705, %v86
    %v1707 = vpop.permute.xlu0 %1706
    %1708 = vset.pattern.permute.xlu0 0
    %1709 = vperm.xlu0 %1708, %v87
    %v1710 = vpop.permute.xlu0 %1709
    %1711 = vset.pattern.permute.xlu0 0
    %1712 = vperm.xlu0 %1711, %v88
    %v1713 = vpop.permute.xlu0 %1712
    %1714 = vset.pattern.permute.xlu0 0
    %1715 = vperm.xlu0 %1714, %v89
    %v1716 = vpop.permute.xlu0 %1715
    %1717 = vset.pattern.permute.xlu0 0
    %1718 = vperm.xlu0 %1717, %v90
    %v1719 = vpop.permute.xlu0 %1718
    %1720 = vset.pattern.permute.xlu0 0
    %1721 = vperm.xlu0 %1720, %v91
    %v1722 = vpop.permute.xlu0 %1721
    %1723 = vset.pattern.permute.xlu0 0
    %1724 = vperm.xlu0 %1723, %v92
    %v1725 = vpop.permute.xlu0 %1724
    %1726 = vset.pattern.permute.xlu0 0
    %1727 = vperm.xlu0 %1726, %v93
    %v1728 = vpop.permute.xlu0 %1727
    %1729 = vset.pattern.permute.xlu0 0
    %1730 = vperm.xlu0 %1729, %v94
    %v1731 = vpop.permute.xlu0 %1730
    %1732 = vset.pattern.permute.xlu0 0
    %1733 = vperm.xlu0 %1732, %v95
    %v1734 = vpop.permute.xlu0 %1733
    %1735 = vset.pattern.permute.xlu0 0
    %1736 = vperm.xlu0 %1735, %v96
    %v1737 = vpop.permute.xlu0 %1736
    %1738 = vset.pattern.permute.xlu0 0
    %1739 = vperm.xlu0 %1738, %v97
    %v1740 = vpop.permute.xlu0 %1739
    %1741 = vset.pattern.permute.xlu0 0
    %1742 = vperm.xlu0 %1741, %v98
    %v1743 = vpop.permute.xlu0 %1742
    %1744 = vset.pattern.permute.xlu0 0
    %1745 = vperm.xlu0 %1744, %v99
    %v1746 = vpop.permute.xlu0 %1745
    %1747 = vset.pattern.permute.xlu0 0
    %1748 = vperm.xlu0 %1747, %v100
    %v1749 = vpop.permute.xlu0 %1748
    %1750 = vset.pattern.permute.xlu0 0
    %1751 = vperm.xlu0 %1750, %v101
    %v1752 = vpop.permute.xlu0 %1751
    %1753 = vset.pattern.permute.xlu0 0
    %1754 = vperm.xlu0 %1753, %v102
    %v1755 = vpop.permute.xlu0 %1754
    %1756 = vset.pattern.permute.xlu0 0
    %1757 = vperm.xlu0 %1756, %v103
    %v1758 = vpop.permute.xlu0 %1757
    %1759 = vset.pattern.permute.xlu0 0
    %1760 = vperm.xlu0 %1759, %v104
    %v1761 = vpop.permute.xlu0 %1760
    %1762 = vset.pattern.permute.xlu0 0
    %1763 = vperm.xlu0 %1762, %v105
    %v1764 = vpop.permute.xlu0 %1763
    %1765 = vset.pattern.permute.xlu0 0
    %1766 = vperm.xlu0 %1765, %v106
    %v1767 = vpop.permute.xlu0 %1766
    %1768 = vset.pattern.permute.xlu0 0
    %1769 = vperm.xlu0 %1768, %v107
    %v1770 = vpop.permute.xlu0 %1769
    %1771 = vset.pattern.permute.xlu0 0
    %1772 = vperm.xlu0 %1771, %v108
    %v1773 = vpop.permute.xlu0 %1772
    %1774 = vset.pattern.permute.xlu0 0
    %1775 = vperm.xlu0 %1774, %v109
    %v1776 = vpop.permute.xlu0 %1775
    %1777 = vset.pattern.permute.xlu0 0
    %1778 = vperm.xlu0 %1777, %v110
    %v1779 = vpop.permute.xlu0 %1778
    %1780 = vset.pattern.permute.xlu0 0
    %1781 = vperm.xlu0 %1780, %v111
    %v1782 = vpop.permute.xlu0 %1781
    %1783 = vset.pattern.permute.xlu0 0
    %1784 = vperm.xlu0 %1783, %v112
    %v1785 = vpop.permute.xlu0 %1784
    %1786 = vset.pattern.permute.xlu0 0
    %1787 = vperm.xlu0 %1786, %v113
    %v1788 = vpop.permute.xlu0 %1787
    %1789 = vset.pattern.permute.xlu0 0
    %1790 = vperm.xlu0 %1789, %v114
    %v1791 = vpop.permute.xlu0 %1790
    %1792 = vset.pattern.permute.xlu0 0
    %1793 = vperm.xlu0 %1792, %v115
    %v1794 = vpop.permute.xlu0 %1793
    %1795 = vset.pattern.permute.xlu0 0
    %1796 = vperm.xlu0 %1795, %v116
    %v1797 = vpop.permute.xlu0 %1796
    %1798 = vset.pattern.permute.xlu0 0
    %1799 = vperm.xlu0 %1798, %v117
    %v1800 = vpop.permute.xlu0 %1799
    %1801 = vset.pattern.permute.xlu0 0
    %1802 = vperm.xlu0 %1801, %v118
    %v1803 = vpop.permute.xlu0 %1802
    %1804 = vset.pattern.permute.xlu0 0
    %1805 = vperm.xlu0 %1804, %v119
    %v1806 = vpop.permute.xlu0 %1805
    %1807 = vset.pattern.permute.xlu0 0
    %1808 = vperm.xlu0 %1807, %v120
    %v1809 = vpop.permute.xlu0 %1808
    %1810 = vset.pattern.permute.xlu0 0
    %1811 = vperm.xlu0 %1810, %v121
    %v1812 = vpop.permute.xlu0 %1811
    %1813 = vset.pattern.permute.xlu0 0
    %1814 = vperm.xlu0 %1813, %v122
    %v1815 = vpop.permute.xlu0 %1814
    %1816 = vset.pattern.permute.xlu0 0
    %1817 = vperm.xlu0 %1816, %v123
    %v1818 = vpop.permute.xlu0 %1817
    %1819 = vset.pattern.permute.xlu0 0
    %1820 = vperm.xlu0 %1819, %v124
    %v1821 = vpop.permute.xlu0 %1820
    %1822 = vset.pattern.permute.xlu0 0
    %1823 = vperm.xlu0 %1822, %v125
    %v1824 = vpop.permute.xlu0 %1823
    %1825 = vset.pattern.permute.xlu0 0
    %1826 = vperm.xlu0 %1825, %v126
    %v1827 = vpop.permute.xlu0 %1826
    %1828 = vset.pattern.permute.xlu0 0
    %1829 = vperm.xlu0 %1828, %v127
    %v1830 = vpop.permute.xlu0 %1829
    %1831 = vset.pattern.permute.xlu0 0
    %1832 = vperm.xlu0 %1831, %v128
    %v1833 = vpop.permute.xlu0 %1832
    %1834 = vset.pattern.permute.xlu0 0
    %1835 = vperm.xlu0 %1834, %v129
    %v1836 = vpop.permute.xlu0 %1835
    %1837 = vset.pattern.permute.xlu0 0
    %1838 = vperm.xlu0 %1837, %v130
    %v1839 = vpop.permute.xlu0 %1838
    %1840 = vset.pattern.permute.xlu0 0
    %1841 = vperm.xlu0 %1840, %v131
    %v1842 = vpop.permute.xlu0 %1841
    %1843 = vset.pattern.permute.xlu0 0
    %1844 = vperm.xlu0 %1843, %v132
    %v1845 = vpop.permute.xlu0 %1844
    %1846 = vset.pattern.permute.xlu0 0
    %1847 = vperm.xlu0 %1846, %v133
    %v1848 = vpop.permute.xlu0 %1847
    %1849 = vset.pattern.permute.xlu0 0
    %1850 = vperm.xlu0 %1849, %v134
    %v1851 = vpop.permute.xlu0 %1850
    %1852 = vset.pattern.permute.xlu0 0
    %1853 = vperm.xlu0 %1852, %v135
    %v1854 = vpop.permute.xlu0 %1853
    %1855 = vset.pattern.permute.xlu0 0
    %1856 = vperm.xlu0 %1855, %v136
    %v1857 = vpop.permute.xlu0 %1856
    %1858 = vset.pattern.permute.xlu0 0
    %1859 = vperm.xlu0 %1858, %v137
    %v1860 = vpop.permute.xlu0 %1859
    %1861 = vset.pattern.permute.xlu0 0
    %1862 = vperm.xlu0 %1861, %v138
    %v1863 = vpop.permute.xlu0 %1862
    %1864 = vset.pattern.permute.xlu0 0
    %1865 = vperm.xlu0 %1864, %v139
    %v1866 = vpop.permute.xlu0 %1865
    %1867 = vset.pattern.permute.xlu0 0
    %1868 = vperm.xlu0 %1867, %v140
    %v1869 = vpop.permute.xlu0 %1868
    %1870 = vset.pattern.permute.xlu0 0
    %1871 = vperm.xlu0 %1870, %v141
    %v1872 = vpop.permute.xlu0 %1871
    %vm1873 = vcmp.eq.s32.totalorder %v1680, %v1683
    %vm1874 = vcmp.eq.s32.totalorder %v1680, %v1686
    %vm1875 = vcmp.eq.s32.totalorder %v1680, %v1689
    %vm1876 = vcmp.eq.s32.totalorder %v1680, %v1692
    %vm1877 = vcmp.eq.s32.totalorder %v1680, %v1695
    %vm1878 = vcmp.eq.s32.totalorder %v1680, %v1698
    %vm1879 = vcmp.eq.s32.totalorder %v1680, %v1701
    %vm1880 = vcmp.eq.s32.totalorder %v1680, %v1704
    %vm1881 = vcmp.eq.s32.totalorder %v1680, %v1707
    %vm1882 = vcmp.eq.s32.totalorder %v1680, %v1710
    %vm1883 = vcmp.eq.s32.totalorder %v1680, %v1713
    %vm1884 = vcmp.eq.s32.totalorder %v1680, %v1716
    %vm1885 = vcmp.eq.s32.totalorder %v1680, %v1719
    %vm1886 = vcmp.eq.s32.totalorder %v1680, %v1722
    %vm1887 = vcmp.eq.s32.totalorder %v1680, %v1725
    %vm1888 = vcmp.eq.s32.totalorder %v1680, %v1728
    %vm1889 = vcmp.eq.s32.totalorder %v1680, %v1731
    %vm1890 = vcmp.eq.s32.totalorder %v1680, %v1734
    %vm1891 = vcmp.eq.s32.totalorder %v1680, %v1737
    %vm1892 = vcmp.eq.s32.totalorder %v1680, %v1740
    %vm1893 = vcmp.eq.s32.totalorder %v1680, %v1743
    %vm1894 = vcmp.eq.s32.totalorder %v1680, %v1746
    %vm1895 = vcmp.eq.s32.totalorder %v1680, %v1749
    %vm1896 = vcmp.eq.s32.totalorder %v1680, %v1752
    %vm1897 = vcmp.eq.s32.totalorder %v1680, %v1755
    %vm1898 = vcmp.eq.s32.totalorder %v1680, %v1758
    %vm1899 = vcmp.eq.s32.totalorder %v1680, %v1761
    %vm1900 = vcmp.eq.s32.totalorder %v1680, %v1764
    %vm1901 = vcmp.eq.s32.totalorder %v1680, %v1767
    %vm1902 = vcmp.eq.s32.totalorder %v1680, %v1770
    %vm1903 = vcmp.eq.s32.totalorder %v1680, %v1773
    %vm1904 = vcmp.eq.s32.totalorder %v1680, %v1776
    %vm1905 = vcmp.eq.s32.totalorder %v1680, %v1779
    %vm1906 = vcmp.eq.s32.totalorder %v1680, %v1782
    %vm1907 = vcmp.eq.s32.totalorder %v1680, %v1785
    %vm1908 = vcmp.eq.s32.totalorder %v1680, %v1788
    %vm1909 = vcmp.eq.s32.totalorder %v1680, %v1791
    %vm1910 = vcmp.eq.s32.totalorder %v1680, %v1794
    %vm1911 = vcmp.eq.s32.totalorder %v1680, %v1797
    %vm1912 = vcmp.eq.s32.totalorder %v1680, %v1800
    %vm1913 = vcmp.eq.s32.totalorder %v1680, %v1803
    %vm1914 = vcmp.eq.s32.totalorder %v1680, %v1806
    %vm1915 = vcmp.eq.s32.totalorder %v1680, %v1809
    %vm1916 = vcmp.eq.s32.totalorder %v1680, %v1812
    %vm1917 = vcmp.eq.s32.totalorder %v1680, %v1815
    %vm1918 = vcmp.eq.s32.totalorder %v1680, %v1818
    %vm1919 = vcmp.eq.s32.totalorder %v1680, %v1821
    %vm1920 = vcmp.eq.s32.totalorder %v1680, %v1824
    %vm1921 = vcmp.eq.s32.totalorder %v1680, %v1827
    %vm1922 = vcmp.eq.s32.totalorder %v1680, %v1830
    %vm1923 = vcmp.eq.s32.totalorder %v1680, %v1833
    %vm1924 = vcmp.eq.s32.totalorder %v1680, %v1836
    %vm1925 = vcmp.eq.s32.totalorder %v1680, %v1839
    %vm1926 = vcmp.eq.s32.totalorder %v1680, %v1842
    %vm1927 = vcmp.eq.s32.totalorder %v1680, %v1845
    %vm1928 = vcmp.eq.s32.totalorder %v1680, %v1848
    %vm1929 = vcmp.eq.s32.totalorder %v1680, %v1851
    %vm1930 = vcmp.eq.s32.totalorder %v1680, %v1854
    %vm1931 = vcmp.eq.s32.totalorder %v1680, %v1857
    %vm1932 = vcmp.eq.s32.totalorder %v1680, %v1860
    %vm1933 = vcmp.eq.s32.totalorder %v1680, %v1863
    %vm1934 = vcmp.eq.s32.totalorder %v1680, %v1866
    %vm1935 = vcmp.eq.s32.totalorder %v1680, %v1869
    %vm1936 = vcmp.eq.s32.totalorder %v1680, %v1872
    %v1937 = vsel %vm1873, 1, 0
    %v1938 = vsel %vm1874, 1, 0
    %v1939 = vsel %vm1875, 1, 0
    %v1940 = vsel %vm1876, 1, 0
    %v1941 = vsel %vm1877, 1, 0
    %v1942 = vsel %vm1878, 1, 0
    %v1943 = vsel %vm1879, 1, 0
    %v1944 = vsel %vm1880, 1, 0
    %v1945 = vsel %vm1881, 1, 0
    %v1946 = vsel %vm1882, 1, 0
    %v1947 = vsel %vm1883, 1, 0
    %v1948 = vsel %vm1884, 1, 0
    %v1949 = vsel %vm1885, 1, 0
    %v1950 = vsel %vm1886, 1, 0
    %v1951 = vsel %vm1887, 1, 0
    %v1952 = vsel %vm1888, 1, 0
    %v1953 = vsel %vm1889, 1, 0
    %v1954 = vsel %vm1890, 1, 0
    %v1955 = vsel %vm1891, 1, 0
    %v1956 = vsel %vm1892, 1, 0
    %v1957 = vsel %vm1893, 1, 0
    %v1958 = vsel %vm1894, 1, 0
    %v1959 = vsel %vm1895, 1, 0
    %v1960 = vsel %vm1896, 1, 0
    %v1961 = vsel %vm1897, 1, 0
    %v1962 = vsel %vm1898, 1, 0
    %v1963 = vsel %vm1899, 1, 0
    %v1964 = vsel %vm1900, 1, 0
    %v1965 = vsel %vm1901, 1, 0
    %v1966 = vsel %vm1902, 1, 0
    %v1967 = vsel %vm1903, 1, 0
    %v1968 = vsel %vm1904, 1, 0
    %v1969 = vsel %vm1905, 1, 0
    %v1970 = vsel %vm1906, 1, 0
    %v1971 = vsel %vm1907, 1, 0
    %v1972 = vsel %vm1908, 1, 0
    %v1973 = vsel %vm1909, 1, 0
    %v1974 = vsel %vm1910, 1, 0
    %v1975 = vsel %vm1911, 1, 0
    %v1976 = vsel %vm1912, 1, 0
    %v1977 = vsel %vm1913, 1, 0
    %v1978 = vsel %vm1914, 1, 0
    %v1979 = vsel %vm1915, 1, 0
    %v1980 = vsel %vm1916, 1, 0
    %v1981 = vsel %vm1917, 1, 0
    %v1982 = vsel %vm1918, 1, 0
    %v1983 = vsel %vm1919, 1, 0
    %v1984 = vsel %vm1920, 1, 0
    %v1985 = vsel %vm1921, 1, 0
    %v1986 = vsel %vm1922, 1, 0
    %v1987 = vsel %vm1923, 1, 0
    %v1988 = vsel %vm1924, 1, 0
    %v1989 = vsel %vm1925, 1, 0
    %v1990 = vsel %vm1926, 1, 0
    %v1991 = vsel %vm1927, 1, 0
    %v1992 = vsel %vm1928, 1, 0
    %v1993 = vsel %vm1929, 1, 0
    %v1994 = vsel %vm1930, 1, 0
    %v1995 = vsel %vm1931, 1, 0
    %v1996 = vsel %vm1932, 1, 0
    %v1997 = vsel %vm1933, 1, 0
    %v1998 = vsel %vm1934, 1, 0
    %v1999 = vsel %vm1935, 1, 0
    %v2000 = vsel %vm1936, 1, 0
    %v2001 = vcvt.s32.f32 %v1937
    %v2002 = vcvt.s32.f32 %v1938
    %v2003 = vcvt.s32.f32 %v1939
    %v2004 = vcvt.s32.f32 %v1940
    %v2005 = vcvt.s32.f32 %v1941
    %v2006 = vcvt.s32.f32 %v1942
    %v2007 = vcvt.s32.f32 %v1943
    %v2008 = vcvt.s32.f32 %v1944
    %v2009 = vcvt.s32.f32 %v1945
    %v2010 = vcvt.s32.f32 %v1946
    %v2011 = vcvt.s32.f32 %v1947
    %v2012 = vcvt.s32.f32 %v1948
    %v2013 = vcvt.s32.f32 %v1949
    %v2014 = vcvt.s32.f32 %v1950
    %v2015 = vcvt.s32.f32 %v1951
    %v2016 = vcvt.s32.f32 %v1952
    %v2017 = vcvt.s32.f32 %v1953
    %v2018 = vcvt.s32.f32 %v1954
    %v2019 = vcvt.s32.f32 %v1955
    %v2020 = vcvt.s32.f32 %v1956
    %v2021 = vcvt.s32.f32 %v1957
    %v2022 = vcvt.s32.f32 %v1958
    %v2023 = vcvt.s32.f32 %v1959
    %v2024 = vcvt.s32.f32 %v1960
    %v2025 = vcvt.s32.f32 %v1961
    %v2026 = vcvt.s32.f32 %v1962
    %v2027 = vcvt.s32.f32 %v1963
    %v2028 = vcvt.s32.f32 %v1964
    %v2029 = vcvt.s32.f32 %v1965
    %v2030 = vcvt.s32.f32 %v1966
    %v2031 = vcvt.s32.f32 %v1967
    %v2032 = vcvt.s32.f32 %v1968
    %v2033 = vcvt.s32.f32 %v1969
    %v2034 = vcvt.s32.f32 %v1970
    %v2035 = vcvt.s32.f32 %v1971
    %v2036 = vcvt.s32.f32 %v1972
    %v2037 = vcvt.s32.f32 %v1973
    %v2038 = vcvt.s32.f32 %v1974
    %v2039 = vcvt.s32.f32 %v1975
    %v2040 = vcvt.s32.f32 %v1976
    %v2041 = vcvt.s32.f32 %v1977
    %v2042 = vcvt.s32.f32 %v1978
    %v2043 = vcvt.s32.f32 %v1979
    %v2044 = vcvt.s32.f32 %v1980
    %v2045 = vcvt.s32.f32 %v1981
    %v2046 = vcvt.s32.f32 %v1982
    %v2047 = vcvt.s32.f32 %v1983
    %v2048 = vcvt.s32.f32 %v1984
    %v2049 = vcvt.s32.f32 %v1985
    %v2050 = vcvt.s32.f32 %v1986
    %v2051 = vcvt.s32.f32 %v1987
    %v2052 = vcvt.s32.f32 %v1988
    %v2053 = vcvt.s32.f32 %v1989
    %v2054 = vcvt.s32.f32 %v1990
    %v2055 = vcvt.s32.f32 %v1991
    %v2056 = vcvt.s32.f32 %v1992
    %v2057 = vcvt.s32.f32 %v1993
    %v2058 = vcvt.s32.f32 %v1994
    %v2059 = vcvt.s32.f32 %v1995
    %v2060 = vcvt.s32.f32 %v1996
    %v2061 = vcvt.s32.f32 %v1997
    %v2062 = vcvt.s32.f32 %v1998
    %v2063 = vcvt.s32.f32 %v1999
    %v2064 = vcvt.s32.f32 %v2000
    %v2065 = vmul.f32 %v2001, %v1039
    %v2066 = vmul.f32 %v2002, %v1040
    %v2067 = vmul.f32 %v2003, %v1041
    %v2068 = vmul.f32 %v2004, %v1042
    %v2069 = vmul.f32 %v2005, %v1043
    %v2070 = vmul.f32 %v2006, %v1044
    %v2071 = vmul.f32 %v2007, %v1045
    %v2072 = vmul.f32 %v2008, %v1046
    %v2073 = vmul.f32 %v2009, %v1047
    %v2074 = vmul.f32 %v2010, %v1048
    %v2075 = vmul.f32 %v2011, %v1049
    %v2076 = vmul.f32 %v2012, %v1050
    %v2077 = vmul.f32 %v2013, %v1051
    %v2078 = vmul.f32 %v2014, %v1052
    %v2079 = vmul.f32 %v2015, %v1053
    %v2080 = vmul.f32 %v2016, %v1054
    %v2081 = vmul.f32 %v2017, %v1055
    %v2082 = vmul.f32 %v2018, %v1056
    %v2083 = vmul.f32 %v2019, %v1057
    %v2084 = vmul.f32 %v2020, %v1058
    %v2085 = vmul.f32 %v2021, %v1059
    %v2086 = vmul.f32 %v2022, %v1060
    %v2087 = vmul.f32 %v2023, %v1061
    %v2088 = vmul.f32 %v2024, %v1062
    %v2089 = vmul.f32 %v2025, %v1063
    %v2090 = vmul.f32 %v2026, %v1064
    %v2091 = vmul.f32 %v2027, %v1065
    %v2092 = vmul.f32 %v2028, %v1066
    %v2093 = vmul.f32 %v2029, %v1067
    %v2094 = vmul.f32 %v2030, %v1068
    %v2095 = vmul.f32 %v2031, %v1069
    %v2096 = vmul.f32 %v2032, %v1070
    %v2097 = vmul.f32 %v2033, %v1071
    %v2098 = vmul.f32 %v2034, %v1072
    %v2099 = vmul.f32 %v2035, %v1073
    %v2100 = vmul.f32 %v2036, %v1074
    %v2101 = vmul.f32 %v2037, %v1075
    %v2102 = vmul.f32 %v2038, %v1076
    %v2103 = vmul.f32 %v2039, %v1077
    %v2104 = vmul.f32 %v2040, %v1078
    %v2105 = vmul.f32 %v2041, %v1079
    %v2106 = vmul.f32 %v2042, %v1080
    %v2107 = vmul.f32 %v2043, %v1081
    %v2108 = vmul.f32 %v2044, %v1082
    %v2109 = vmul.f32 %v2045, %v1083
    %v2110 = vmul.f32 %v2046, %v1084
    %v2111 = vmul.f32 %v2047, %v1085
    %v2112 = vmul.f32 %v2048, %v1086
    %v2113 = vmul.f32 %v2049, %v1087
    %v2114 = vmul.f32 %v2050, %v1088
    %v2115 = vmul.f32 %v2051, %v1089
    %v2116 = vmul.f32 %v2052, %v1090
    %v2117 = vmul.f32 %v2053, %v1091
    %v2118 = vmul.f32 %v2054, %v1092
    %v2119 = vmul.f32 %v2055, %v1093
    %v2120 = vmul.f32 %v2056, %v1094
    %v2121 = vmul.f32 %v2057, %v1095
    %v2122 = vmul.f32 %v2058, %v1096
    %v2123 = vmul.f32 %v2059, %v1097
    %v2124 = vmul.f32 %v2060, %v1098
    %v2125 = vmul.f32 %v2061, %v1099
    %v2126 = vmul.f32 %v2062, %v1100
    %v2127 = vmul.f32 %v2063, %v1101
    %v2128 = vmul.f32 %v2064, %v1102
    %v2129 = vsel %vm334, %v2065, 0.0
    %v2130 = vsel %vm334, %v2066, 0.0
    %v2131 = vadd.f32 %v2129, %v2130
    %v2132 = vsel %vm334, %v2067, 0.0
    %v2133 = vadd.f32 %v2131, %v2132
    %v2134 = vsel %vm334, %v2068, 0.0
    %v2135 = vadd.f32 %v2133, %v2134
    %v2136 = vsel %vm334, %v2069, 0.0
    %v2137 = vadd.f32 %v2135, %v2136
    %v2138 = vsel %vm334, %v2070, 0.0
    %v2139 = vadd.f32 %v2137, %v2138
    %v2140 = vsel %vm334, %v2071, 0.0
    %v2141 = vadd.f32 %v2139, %v2140
    %v2142 = vsel %vm334, %v2072, 0.0
    %v2143 = vadd.f32 %v2141, %v2142
    %v2144 = vsel %vm334, %v2073, 0.0
    %v2145 = vadd.f32 %v2143, %v2144
    %v2146 = vsel %vm334, %v2074, 0.0
    %v2147 = vadd.f32 %v2145, %v2146
    %v2148 = vsel %vm334, %v2075, 0.0
    %v2149 = vadd.f32 %v2147, %v2148
    %v2150 = vsel %vm334, %v2076, 0.0
    %v2151 = vadd.f32 %v2149, %v2150
    %v2152 = vsel %vm334, %v2077, 0.0
    %v2153 = vadd.f32 %v2151, %v2152
    %v2154 = vsel %vm334, %v2078, 0.0
    %v2155 = vadd.f32 %v2153, %v2154
    %v2156 = vsel %vm334, %v2079, 0.0
    %v2157 = vadd.f32 %v2155, %v2156
    %v2158 = vsel %vm334, %v2080, 0.0
    %v2159 = vadd.f32 %v2157, %v2158
    %v2160 = vsel %vm334, %v2081, 0.0
    %v2161 = vadd.f32 %v2159, %v2160
    %v2162 = vsel %vm334, %v2082, 0.0
    %v2163 = vadd.f32 %v2161, %v2162
    %v2164 = vsel %vm334, %v2083, 0.0
    %v2165 = vadd.f32 %v2163, %v2164
    %v2166 = vsel %vm334, %v2084, 0.0
    %v2167 = vadd.f32 %v2165, %v2166
    %v2168 = vsel %vm334, %v2085, 0.0
    %v2169 = vadd.f32 %v2167, %v2168
    %v2170 = vsel %vm334, %v2086, 0.0
    %v2171 = vadd.f32 %v2169, %v2170
    %v2172 = vsel %vm334, %v2087, 0.0
    %v2173 = vadd.f32 %v2171, %v2172
    %v2174 = vsel %vm334, %v2088, 0.0
    %v2175 = vadd.f32 %v2173, %v2174
    %v2176 = vsel %vm334, %v2089, 0.0
    %v2177 = vadd.f32 %v2175, %v2176
    %v2178 = vsel %vm334, %v2090, 0.0
    %v2179 = vadd.f32 %v2177, %v2178
    %v2180 = vsel %vm334, %v2091, 0.0
    %v2181 = vadd.f32 %v2179, %v2180
    %v2182 = vsel %vm334, %v2092, 0.0
    %v2183 = vadd.f32 %v2181, %v2182
    %v2184 = vsel %vm334, %v2093, 0.0
    %v2185 = vadd.f32 %v2183, %v2184
    %v2186 = vsel %vm334, %v2094, 0.0
    %v2187 = vadd.f32 %v2185, %v2186
    %v2188 = vsel %vm334, %v2095, 0.0
    %v2189 = vadd.f32 %v2187, %v2188
    %v2190 = vsel %vm334, %v2096, 0.0
    %v2191 = vadd.f32 %v2189, %v2190
    %v2192 = vsel %vm334, %v2097, 0.0
    %v2193 = vadd.f32 %v2191, %v2192
    %v2194 = vsel %vm334, %v2098, 0.0
    %v2195 = vadd.f32 %v2193, %v2194
    %v2196 = vsel %vm334, %v2099, 0.0
    %v2197 = vadd.f32 %v2195, %v2196
    %v2198 = vsel %vm334, %v2100, 0.0
    %v2199 = vadd.f32 %v2197, %v2198
    %v2200 = vsel %vm334, %v2101, 0.0
    %v2201 = vadd.f32 %v2199, %v2200
    %v2202 = vsel %vm334, %v2102, 0.0
    %v2203 = vadd.f32 %v2201, %v2202
    %v2204 = vsel %vm334, %v2103, 0.0
    %v2205 = vadd.f32 %v2203, %v2204
    %v2206 = vsel %vm334, %v2104, 0.0
    %v2207 = vadd.f32 %v2205, %v2206
    %v2208 = vsel %vm334, %v2105, 0.0
    %v2209 = vadd.f32 %v2207, %v2208
    %v2210 = vsel %vm334, %v2106, 0.0
    %v2211 = vadd.f32 %v2209, %v2210
    %v2212 = vsel %vm334, %v2107, 0.0
    %v2213 = vadd.f32 %v2211, %v2212
    %v2214 = vsel %vm334, %v2108, 0.0
    %v2215 = vadd.f32 %v2213, %v2214
    %v2216 = vsel %vm334, %v2109, 0.0
    %v2217 = vadd.f32 %v2215, %v2216
    %v2218 = vsel %vm334, %v2110, 0.0
    %v2219 = vadd.f32 %v2217, %v2218
    %v2220 = vsel %vm334, %v2111, 0.0
    %v2221 = vadd.f32 %v2219, %v2220
    %v2222 = vsel %vm334, %v2112, 0.0
    %v2223 = vadd.f32 %v2221, %v2222
    %v2224 = vsel %vm334, %v2113, 0.0
    %v2225 = vadd.f32 %v2223, %v2224
    %v2226 = vsel %vm334, %v2114, 0.0
    %v2227 = vadd.f32 %v2225, %v2226
    %v2228 = vsel %vm334, %v2115, 0.0
    %v2229 = vadd.f32 %v2227, %v2228
    %v2230 = vsel %vm334, %v2116, 0.0
    %v2231 = vadd.f32 %v2229, %v2230
    %v2232 = vsel %vm334, %v2117, 0.0
    %v2233 = vadd.f32 %v2231, %v2232
    %v2234 = vsel %vm334, %v2118, 0.0
    %v2235 = vadd.f32 %v2233, %v2234
    %v2236 = vsel %vm334, %v2119, 0.0
    %v2237 = vadd.f32 %v2235, %v2236
    %v2238 = vsel %vm334, %v2120, 0.0
    %v2239 = vadd.f32 %v2237, %v2238
    %v2240 = vsel %vm334, %v2121, 0.0
    %v2241 = vadd.f32 %v2239, %v2240
    %v2242 = vsel %vm334, %v2122, 0.0
    %v2243 = vadd.f32 %v2241, %v2242
    %v2244 = vsel %vm334, %v2123, 0.0
    %v2245 = vadd.f32 %v2243, %v2244
    %v2246 = vsel %vm334, %v2124, 0.0
    %v2247 = vadd.f32 %v2245, %v2246
    %v2248 = vsel %vm334, %v2125, 0.0
    %v2249 = vadd.f32 %v2247, %v2248
    %v2250 = vsel %vm334, %v2126, 0.0
    %v2251 = vadd.f32 %v2249, %v2250
    %v2252 = vsel %vm334, %v2127, 0.0
    %v2253 = vadd.f32 %v2251, %v2252
    %v2254 = vsel %vm334, %v2128, 0.0
    %v2255 = vadd.f32 %v2253, %v2254
    %2256 = vadd.xlane.f32.xlu0 %v2255
    %v2257 = vpop.xlane.xlu0 %2256
    %v2258 = vrot.slane %v2257, 4
    %v2259 = vadd.f32 %v2257, %v2258
    %v2260 = vrot.slane %v2259, 2
    %v2261 = vadd.f32 %v2259, %v2260
    %v2262 = vrot.slane %v2261, 1
    %v2263 = vadd.f32 %v2261, %v2262
    %s2264 = vtos %v2263
    %s2265 = ssub.f32 0.0, %s2264
    %vm2266 = vcmask 7168
    %v2267 = vsel %vm2266, %v270, 0.0
    %v2268 = vsel %vm2266, %v271, 0.0
    %v2269 = vadd.f32 %v2267, %v2268
    %v2270 = vsel %vm2266, %v272, 0.0
    %v2271 = vadd.f32 %v2269, %v2270
    %v2272 = vsel %vm2266, %v273, 0.0
    %v2273 = vadd.f32 %v2271, %v2272
    %v2274 = vsel %vm2266, %v274, 0.0
    %v2275 = vadd.f32 %v2273, %v2274
    %v2276 = vsel %vm2266, %v275, 0.0
    %v2277 = vadd.f32 %v2275, %v2276
    %v2278 = vsel %vm2266, %v276, 0.0
    %v2279 = vadd.f32 %v2277, %v2278
    %v2280 = vsel %vm2266, %v277, 0.0
    %v2281 = vadd.f32 %v2279, %v2280
    %v2282 = vsel %vm2266, %v278, 0.0
    %v2283 = vadd.f32 %v2281, %v2282
    %v2284 = vsel %vm2266, %v279, 0.0
    %v2285 = vadd.f32 %v2283, %v2284
    %v2286 = vsel %vm2266, %v280, 0.0
    %v2287 = vadd.f32 %v2285, %v2286
    %v2288 = vsel %vm2266, %v281, 0.0
    %v2289 = vadd.f32 %v2287, %v2288
    %v2290 = vsel %vm2266, %v282, 0.0
    %v2291 = vadd.f32 %v2289, %v2290
    %v2292 = vsel %vm2266, %v283, 0.0
    %v2293 = vadd.f32 %v2291, %v2292
    %v2294 = vsel %vm2266, %v284, 0.0
    %v2295 = vadd.f32 %v2293, %v2294
    %v2296 = vsel %vm2266, %v285, 0.0
    %v2297 = vadd.f32 %v2295, %v2296
    %v2298 = vsel %vm2266, %v286, 0.0
    %v2299 = vadd.f32 %v2297, %v2298
    %v2300 = vsel %vm2266, %v287, 0.0
    %v2301 = vadd.f32 %v2299, %v2300
    %v2302 = vsel %vm2266, %v288, 0.0
    %v2303 = vadd.f32 %v2301, %v2302
    %v2304 = vsel %vm2266, %v289, 0.0
    %v2305 = vadd.f32 %v2303, %v2304
    %v2306 = vsel %vm2266, %v290, 0.0
    %v2307 = vadd.f32 %v2305, %v2306
    %v2308 = vsel %vm2266, %v291, 0.0
    %v2309 = vadd.f32 %v2307, %v2308
    %v2310 = vsel %vm2266, %v292, 0.0
    %v2311 = vadd.f32 %v2309, %v2310
    %v2312 = vsel %vm2266, %v293, 0.0
    %v2313 = vadd.f32 %v2311, %v2312
    %v2314 = vsel %vm2266, %v294, 0.0
    %v2315 = vadd.f32 %v2313, %v2314
    %v2316 = vsel %vm2266, %v295, 0.0
    %v2317 = vadd.f32 %v2315, %v2316
    %v2318 = vsel %vm2266, %v296, 0.0
    %v2319 = vadd.f32 %v2317, %v2318
    %v2320 = vsel %vm2266, %v297, 0.0
    %v2321 = vadd.f32 %v2319, %v2320
    %v2322 = vsel %vm2266, %v298, 0.0
    %v2323 = vadd.f32 %v2321, %v2322
    %v2324 = vsel %vm2266, %v299, 0.0
    %v2325 = vadd.f32 %v2323, %v2324
    %v2326 = vsel %vm2266, %v300, 0.0
    %v2327 = vadd.f32 %v2325, %v2326
    %v2328 = vsel %vm2266, %v301, 0.0
    %v2329 = vadd.f32 %v2327, %v2328
    %v2330 = vsel %vm2266, %v302, 0.0
    %v2331 = vadd.f32 %v2329, %v2330
    %v2332 = vsel %vm2266, %v303, 0.0
    %v2333 = vadd.f32 %v2331, %v2332
    %v2334 = vsel %vm2266, %v304, 0.0
    %v2335 = vadd.f32 %v2333, %v2334
    %v2336 = vsel %vm2266, %v305, 0.0
    %v2337 = vadd.f32 %v2335, %v2336
    %v2338 = vsel %vm2266, %v306, 0.0
    %v2339 = vadd.f32 %v2337, %v2338
    %v2340 = vsel %vm2266, %v307, 0.0
    %v2341 = vadd.f32 %v2339, %v2340
    %v2342 = vsel %vm2266, %v308, 0.0
    %v2343 = vadd.f32 %v2341, %v2342
    %v2344 = vsel %vm2266, %v309, 0.0
    %v2345 = vadd.f32 %v2343, %v2344
    %v2346 = vsel %vm2266, %v310, 0.0
    %v2347 = vadd.f32 %v2345, %v2346
    %v2348 = vsel %vm2266, %v311, 0.0
    %v2349 = vadd.f32 %v2347, %v2348
    %v2350 = vsel %vm2266, %v312, 0.0
    %v2351 = vadd.f32 %v2349, %v2350
    %v2352 = vsel %vm2266, %v313, 0.0
    %v2353 = vadd.f32 %v2351, %v2352
    %v2354 = vsel %vm2266, %v314, 0.0
    %v2355 = vadd.f32 %v2353, %v2354
    %v2356 = vsel %vm2266, %v315, 0.0
    %v2357 = vadd.f32 %v2355, %v2356
    %v2358 = vsel %vm2266, %v316, 0.0
    %v2359 = vadd.f32 %v2357, %v2358
    %v2360 = vsel %vm2266, %v317, 0.0
    %v2361 = vadd.f32 %v2359, %v2360
    %v2362 = vsel %vm2266, %v318, 0.0
    %v2363 = vadd.f32 %v2361, %v2362
    %v2364 = vsel %vm2266, %v319, 0.0
    %v2365 = vadd.f32 %v2363, %v2364
    %v2366 = vsel %vm2266, %v320, 0.0
    %v2367 = vadd.f32 %v2365, %v2366
    %v2368 = vsel %vm2266, %v321, 0.0
    %v2369 = vadd.f32 %v2367, %v2368
    %v2370 = vsel %vm2266, %v322, 0.0
    %v2371 = vadd.f32 %v2369, %v2370
    %v2372 = vsel %vm2266, %v323, 0.0
    %v2373 = vadd.f32 %v2371, %v2372
    %v2374 = vsel %vm2266, %v324, 0.0
    %v2375 = vadd.f32 %v2373, %v2374
    %v2376 = vsel %vm2266, %v325, 0.0
    %v2377 = vadd.f32 %v2375, %v2376
    %v2378 = vsel %vm2266, %v326, 0.0
    %v2379 = vadd.f32 %v2377, %v2378
    %v2380 = vsel %vm2266, %v327, 0.0
    %v2381 = vadd.f32 %v2379, %v2380
    %v2382 = vsel %vm2266, %v328, 0.0
    %v2383 = vadd.f32 %v2381, %v2382
    %v2384 = vsel %vm2266, %v329, 0.0
    %v2385 = vadd.f32 %v2383, %v2384
    %v2386 = vsel %vm2266, %v330, 0.0
    %v2387 = vadd.f32 %v2385, %v2386
    %v2388 = vsel %vm2266, %v331, 0.0
    %v2389 = vadd.f32 %v2387, %v2388
    %v2390 = vsel %vm2266, %v332, 0.0
    %v2391 = vadd.f32 %v2389, %v2390
    %v2392 = vsel %vm2266, %v333, 0.0
    %v2393 = vadd.f32 %v2391, %v2392
    %2394 = vadd.xlane.f32.xlu0 %v2393
    %v2395 = vpop.xlane.xlu0 %2394
    %v2396 = vrot.slane %v2395, 4
    %v2397 = vadd.f32 %v2395, %v2396
    %v2398 = vrot.slane %v2397, 2
    %v2399 = vadd.f32 %v2397, %v2398
    %v2400 = vrot.slane %v2399, 1
    %v2401 = vadd.f32 %v2399, %v2400
    %s2402 = vtos %v2401
    %vm2403 = vcmp.eq.s32.totalorder %v1680, 0
    %vm2404 = vcmp.eq.s32.totalorder %v1680, 1
    %v2405 = vstv %s2402
    %v2406 = vsel %vm2404, %v2405, 0.0
    %v2407 = vstv %s2265
    %v2408 = vsel %vm2403, %v2407, %v2406
    %2409 = vst [vmem:[#allocation2] sm:$0x1] %v2408
    // Predicated region
    $region10: #{tpu_custom_call.1} parent=1 // pred_check
      _
    $region11: #{tpu_custom_call.1} parent=1 // pred_check_branch
      %2411 = sbr.rel (0) target = $region13
    $region12: #{tpu_custom_call.1} parent=1 // pred_region
      _
    $region13: #{tpu_custom_call.1} parent=1 // pred_fallthru
      _
    // Predicated region
    $region14: #{tpu_custom_call.1} parent=1 // pred_check
      _
    $region15: #{tpu_custom_call.1} parent=1 // pred_check_branch
      %2413 = sbr.rel (0) target = $region17
    $region16: #{tpu_custom_call.1} parent=1 // pred_region
      %s2415 = ssub.s32 16, 16
      %2416 = vsyncadd [#allocation3], %s2415
      %s2418 = sshll.u32 [#allocation2], 4
      %s2419 = int_to_ptr.vmem [resolvable:$true] %s2418
      %2421 = dma.vmem_to_hbm [thread:$0]  %s2419, 16, %s3, [#allocation3]
    $region17: #{tpu_custom_call.1} parent=1 // pred_fallthru
      _
    // Predicated region
    $region18: #{tpu_custom_call.1} parent=1 // pred_check
      _
    $region19: #{tpu_custom_call.1} parent=1 // pred_check_branch
      %2423 = sbr.rel (0) target = $region21
    $region20: #{tpu_custom_call.1} parent=1 // pred_region
      _
    $region21: #{tpu_custom_call.1} parent=1 // pred_fallthru
      _
    // Predicated region
    $region22: #{tpu_custom_call.1} parent=1 // pred_check
      _
    $region23: #{tpu_custom_call.1} parent=1 // pred_check_branch
      %2425 = sbr.rel (0) target = $region25
    $region24: #{tpu_custom_call.1} parent=1 // pred_region
      %2426 = dma.done [#allocation3], 16
    $region25: #{tpu_custom_call.1} parent=1 // pred_fallthru
      _
    %2427 = vsyncpa [#allocation3], 1

</llo_original>
